<compile_context>
chip_gen: v5e
topology: v5e:2x2
jax: 0.10.0
libtpu: 0.0.40
codegen_flags: <defaults>
</compile_context>

<pallas_src>
import functools

import jax
import jax.numpy as jnp
from jax.experimental import pallas as pl
from jax.experimental.pallas import tpu as pltpu


# ---------------------------------------------------------------------------
# positional embedding (pure JAX glue, matches get_posembed_linear)
# ---------------------------------------------------------------------------
def get_posembed_linear(length, dim, dtype=jnp.float32):
    pos = jnp.arange(length, dtype=jnp.float32)
    omega = jnp.arange(dim // 2, dtype=jnp.float32) / (dim / 2.0)
    omega = 1.0 / (10000.0 ** omega)
    out = jnp.outer(pos, omega)                       # (length, dim//2)
    return jnp.concatenate([jnp.sin(out), jnp.cos(out)], axis=1).astype(dtype)


# ---------------------------------------------------------------------------
# VMEM budgeting helpers (generation-aware, with a safe fallback)
# ---------------------------------------------------------------------------
def _tpu_vmem_capacity():
    try:
        return int(pltpu.get_tpu_info().vmem_capacity_bytes)
    except Exception:
        return 64 * 1024 * 1024          # conservative (v7x per-core VMEM)


def _vmem_limit():
    # scoped-VMEM limit for each pallas_call; leave headroom for compiler scratch
    return int(min(_tpu_vmem_capacity() * 3 // 4, 96 * 1024 * 1024))


def _row_batch_budget():
    return int(min(_tpu_vmem_capacity() // 6, 12 * 1024 * 1024))


def _choose_row_batch(n_rows, seq_q, chan, w_itemsize):
    """Largest divisor TB of n_rows whose blocks + weights + in-kernel
    temporaries fit the budget, keeping >=2 grid steps when possible so both
    v7x TensorCores get work."""
    budget = _row_batch_budget()
    s_full = 2 * seq_q
    # grid-invariant operands (double-buffered by the pipeline): 4x(C,C)
    # weights (mxu dtype) + pos halves + gamma/beta/out-bias (f32).
    fixed = 2 * (4 * chan * chan * w_itemsize + (2 * seq_q * chan + 3 * chan) * 4)
    # per row-batch unit: pipelined prim/ref/out blocks (x2 buffers, f32) plus
    # a conservative estimate of the in-kernel temporaries (LN, q/k/v,
    # per-head scores, attention output, bf16 copies).
    per_tb = 2 * (3 * seq_q * chan * 4) + (20 * seq_q * chan + 3 * seq_q * s_full) * 4
    cap = n_rows if n_rows < 2 else n_rows // 2
    best = 1
    for tb in range(1, cap + 1):
        if n_rows % tb:
            continue
        if fixed + tb * per_tb <= budget:
            best = tb
    return best


# ---------------------------------------------------------------------------
# fused (posembed -> LayerNorm -> MHSA (kept queries only) -> out projection)
# ---------------------------------------------------------------------------
def _ln_attn_kernel(prim_ref, ref_ref, pos_a_ref, pos_b_ref,
                    wq_ref, wk_ref, wv_ref, wo_ref, bo_ref,
                    gamma_ref, beta_ref, o_ref, *,
                    num_heads, head_dim, scale, eps, mxu_dtype):
    TB, Sq, C = prim_ref.shape
    S = 2 * Sq

    gamma = gamma_ref[...].astype(jnp.float32)              # (1, C)
    beta = beta_ref[...].astype(jnp.float32)

    # sequence = [primary half | reference half]; pos-embed split per half.
    xa = prim_ref[...].astype(jnp.float32) + pos_a_ref[...].astype(jnp.float32)[None]
    xb = ref_ref[...].astype(jnp.float32) + pos_b_ref[...].astype(jnp.float32)[None]

    def _ln(x):                                             # LayerNorm over C
        mean = jnp.mean(x, axis=-1, keepdims=True)
        var = jnp.mean((x - mean) ** 2, axis=-1, keepdims=True)
        return (x - mean) * jax.lax.rsqrt(var + eps) * gamma + beta

    na = _ln(xa)                                            # (TB, Sq, C)
    nb = _ln(xb)                                            # (TB, Sq, C)

    # queries: only the kept (primary) half; keys/values: full sequence.
    q_in = na.reshape(TB * Sq, C).astype(mxu_dtype)
    kv = jnp.concatenate([na, nb], axis=1)                  # (TB, S, C) in VMEM
    kv_in = kv.reshape(TB * S, C).astype(mxu_dtype)

    # big-M projections on the MXU; weights are pre-cast to mxu_dtype outside.
    q = jnp.dot(q_in, wq_ref[...], preferred_element_type=jnp.float32)
    k = jnp.dot(kv_in, wk_ref[...], preferred_element_type=jnp.float32)
    v = jnp.dot(kv_in, wv_ref[...], preferred_element_type=jnp.float32)

    q3 = q.reshape(TB, Sq, C)
    k3 = k.reshape(TB, S, C)
    v3 = v.reshape(TB, S, C)

    # static per-head unroll (num_heads is small; default 1 in the module).
    # TODO(synk): fold heads into a single batched einsum once multi-batch-dim
    # dot_general lowering is available; for nh=1 the slices below are no-ops.
    head_outs = []
    for h in range(num_heads):
        lo = h * head_dim
        qh = q3[:, :, lo:lo + head_dim].astype(mxu_dtype)   # (TB, Sq, hd)
        kh = k3[:, :, lo:lo + head_dim].astype(mxu_dtype)   # (TB, S,  hd)
        vh = v3[:, :, lo:lo + head_dim].astype(mxu_dtype)
        s = jnp.einsum('bqd,bkd->bqk', qh, kh,
                       preferred_element_type=jnp.float32) * scale   # (TB,Sq,S)
        m = jnp.max(s, axis=-1, keepdims=True)
        p = jnp.exp(s - m)
        denom = jnp.sum(p, axis=-1, keepdims=True)
        oh = jnp.einsum('bqk,bkd->bqd', p.astype(mxu_dtype), vh,
                        preferred_element_type=jnp.float32)
        head_outs.append(oh / denom)                        # exact normalization
    attn = head_outs[0] if num_heads == 1 else jnp.concatenate(head_outs, axis=-1)

    out = jnp.dot(attn.reshape(TB * Sq, C).astype(mxu_dtype), wo_ref[...],
                  preferred_element_type=jnp.float32)
    out = out + bo_ref[...].astype(jnp.float32)
    # TODO(synk): for C not a multiple of 128, packing the store as (TB, Sq*C)
    # would make it lane-dense at the cost of an in-kernel relayout.
    o_ref[...] = out.reshape(TB, Sq, C).astype(o_ref.dtype)


def ln_attention(prim, ref, pos_a, pos_b, wq, wk, wv, wo, bo, gamma, beta, *,
                 num_heads, eps=1e-5, mxu_dtype=jnp.bfloat16):
    """prim/ref: (N, Sq, C) halves of the attention sequence -> (N, Sq, C)
    (only the kept query half is computed and returned)."""
    N, Sq, C = prim.shape
    assert C % num_heads == 0
    head_dim = C // num_heads
    scale = 1.0 / (head_dim ** 0.5)
    w_itemsize = jnp.dtype(mxu_dtype).itemsize
    tb = _choose_row_batch(N, Sq, C, w_itemsize)

    # cast matmul weights once, outside the grid loop (halves weight DMA too).
    wq, wk, wv, wo = (w.astype(mxu_dtype) for w in (wq, wk, wv, wo))

    kernel = functools.partial(_ln_attn_kernel, num_heads=num_heads,
                               head_dim=head_dim, scale=scale, eps=eps,
                               mxu_dtype=mxu_dtype)
    full2 = lambda i: (0, 0)
    row_blk = lambda i: (i, 0, 0)
    # TODO(synk): mark the grid-invariant weight specs pipeline_mode=pl.Buffered(1)
    # (single-buffer) for very large C on v7x once validated on the target jax.
    return pl.pallas_call(
        kernel,
        out_shape=jax.ShapeDtypeStruct((N, Sq, C), prim.dtype),
        grid=(N // tb,),
        in_specs=[
            pl.BlockSpec((tb, Sq, C), row_blk),     # primary half
            pl.BlockSpec((tb, Sq, C), row_blk),     # reference half
            pl.BlockSpec((Sq, C), full2),           # pos embed (primary half)
            pl.BlockSpec((Sq, C), full2),           # pos embed (reference half)
            pl.BlockSpec((C, C), full2),            # wq
            pl.BlockSpec((C, C), full2),            # wk
            pl.BlockSpec((C, C), full2),            # wv
            pl.BlockSpec((C, C), full2),            # wo
            pl.BlockSpec((1, C), full2),            # out bias
            pl.BlockSpec((1, C), full2),            # ln gamma
            pl.BlockSpec((1, C), full2),            # ln beta
        ],
        out_specs=pl.BlockSpec((tb, Sq, C), row_blk),
        compiler_params=pltpu.CompilerParams(
            dimension_semantics=("parallel",),
            vmem_limit_bytes=_vmem_limit()),
    )(prim, ref, pos_a, pos_b, wq, wk, wv, wo, bo, gamma, beta)


# ---------------------------------------------------------------------------
# 3x3 conv (padding=1): 9 shifted matmuls accumulated in VMEM (no im2col HBM blowup)
# ---------------------------------------------------------------------------
def _conv3x3_kernel(xp_ref, w_ref, b_ref, o_ref, *, mxu_dtype):
    _, Hp, Wp, Cin = xp_ref.shape
    H, W = Hp - 2, Wp - 2
    Cout = o_ref.shape[-1]
    xp = xp_ref[...]                                        # (1, H+2, W+2, Cin) f32
    acc = jnp.zeros((H * W, Cout), jnp.float32)
    for t in range(9):                                      # static unroll over taps
        kh, kw = divmod(t, 3)
        tap = xp[0, kh:kh + H, kw:kw + W, :].reshape(H * W, Cin).astype(mxu_dtype)
        acc = acc + jnp.dot(tap, w_ref[t], preferred_element_type=jnp.float32)
    out = acc + b_ref[...].astype(jnp.float32)
    o_ref[...] = out.reshape(1, H, W, Cout).astype(o_ref.dtype)


def conv2d_3x3(x_nhwc, w, b, *, mxu_dtype=jnp.bfloat16):
    """x_nhwc: (B,H,W,Cin), w: (3,3,Cin,Cout) (HWIO), b: (1,Cout) -> (B,H,W,Cout)."""
    B, H, W, Cin = x_nhwc.shape
    Cout = w.shape[-1]
    w9 = w.reshape(9, Cin, Cout).astype(mxu_dtype)          # cast once, outside grid
    xp = jnp.pad(x_nhwc, ((0, 0), (1, 1), (1, 1), (0, 0)))  # single pad, no 9x im2col
    kernel = functools.partial(_conv3x3_kernel, mxu_dtype=mxu_dtype)
    # TODO(synk): for production channel counts (Cin >= 320) add a grid axis over
    # taps / Cin chunks with an f32 accumulator scratch so the weight block fits
    # v7x's 64 MiB VMEM; demo shapes fit comfortably as a single block.
    return pl.pallas_call(
        kernel,
        out_shape=jax.ShapeDtypeStruct((B, H, W, Cout), x_nhwc.dtype),
        grid=(B,),
        in_specs=[
            pl.BlockSpec((1, H + 2, W + 2, Cin), lambda i: (i, 0, 0, 0)),
            pl.BlockSpec((9, Cin, Cout), lambda i: (0, 0, 0)),
            pl.BlockSpec((1, Cout), lambda i: (0, 0)),
        ],
        out_specs=pl.BlockSpec((1, H, W, Cout), lambda i: (i, 0, 0, 0)),
        compiler_params=pltpu.CompilerParams(
            dimension_semantics=("parallel",),
            vmem_limit_bytes=_vmem_limit()),
    )(xp, w9, b)


# ---------------------------------------------------------------------------
# SKReferenceAttentionV5 forward
# ---------------------------------------------------------------------------
def sk_reference_attention_v5(hidden_states, ref_stats, num_frames, params,
                              *, mxu_dtype=jnp.bfloat16):
    """hidden_states, ref_stats: NCHW (B, C, H, W)."""
    B, C, H, W = hidden_states.shape
    if ref_stats.shape[0] != B:
        ref_stats = jnp.repeat(ref_stats, num_frames, axis=0)

    num_heads = params["num_heads"]
    eps = params["norm_eps"]

    # The reference module builds pose_embed2 with length 2*W even though the
    # branch-2 sequence length is 2*H (implicit H == W assumption).
    assert H == W, "SKReferenceAttentionV5 assumes square feature maps"

    pos = get_posembed_linear(2 * W, C, dtype=hidden_states.dtype)
    pos_a, pos_b = pos[:W], pos[W:]

    # ---- branch 1: sequence along width = [hidden row | ref row] -----------
    prim1 = jnp.transpose(hidden_states, (0, 2, 3, 1)).reshape(B * H, W, C)
    ref1 = jnp.transpose(ref_stats, (0, 2, 3, 1)).reshape(B * H, W, C)
    a1 = params["attn1"]
    res1 = ln_attention(prim1, ref1, pos_a, pos_b,
                        a1["wq"], a1["wk"], a1["wv"], a1["wo"], a1["bo"],
                        params["ln_gamma"], params["ln_beta"],
                        num_heads=num_heads, eps=eps, mxu_dtype=mxu_dtype)
    res1 = res1.reshape(B, H, W, C)                         # NHWC, already :W only

    # ---- branch 2: sequence along height = [res1 column | ref column] ------
    prim2 = jnp.transpose(res1, (0, 2, 1, 3)).reshape(B * W, H, C)
    ref2 = jnp.transpose(ref_stats, (0, 3, 2, 1)).reshape(B * W, H, C)
    a2 = params["attn2"]
    res2 = ln_attention(prim2, ref2, pos_a, pos_b,
                        a2["wq"], a2["wk"], a2["wv"], a2["wo"], a2["bo"],
                        params["ln_gamma"], params["ln_beta"],
                        num_heads=num_heads, eps=eps, mxu_dtype=mxu_dtype)
    res2 = jnp.transpose(res2.reshape(B, W, H, C), (0, 2, 1, 3))   # NHWC, :H only

    # ---- zero-initialised 3x3 conv projection + residual -------------------
    conv_out = conv2d_3x3(res2, params["conv_w"], params["conv_b"],
                          mxu_dtype=mxu_dtype)
    conv_out = jnp.transpose(conv_out, (0, 3, 1, 2))        # NCHW
    return hidden_states + conv_out


# ---------------------------------------------------------------------------
# plain-JAX references (for sanity checking)
# ---------------------------------------------------------------------------
def _ln_attention_ref(prim, ref, pos, wq, wk, wv, wo, bo, gamma, beta, *,
                      num_heads, eps):
    N, Sq, C = prim.shape
    hd = C // num_heads
    x = jnp.concatenate([prim, ref], axis=1) + pos[None]
    mean = x.mean(-1, keepdims=True)
    var = ((x - mean) ** 2).mean(-1, keepdims=True)
    xn = (x - mean) / jnp.sqrt(var + eps) * gamma + beta
    S = 2 * Sq
    q = (xn @ wq).reshape(N, S, num_heads, hd).transpose(0, 2, 1, 3)
    k = (xn @ wk).reshape(N, S, num_heads, hd).transpose(0, 2, 1, 3)
    v = (xn @ wv).reshape(N, S, num_heads, hd).transpose(0, 2, 1, 3)
    s = jnp.einsum('bhqd,bhkd->bhqk', q, k) / jnp.sqrt(float(hd))
    p = jax.nn.softmax(s, axis=-1)
    o = jnp.einsum('bhqk,bhkd->bhqd', p, v).transpose(0, 2, 1, 3).reshape(N, S, C)
    return (o @ wo + bo)[:, :Sq, :]


# ---------------------------------------------------------------------------
# deterministic parameter construction (matches __init__ shapes)
# ---------------------------------------------------------------------------
def make_params(key, in_channels, num_heads):
    C = in_channels
    ks = jax.random.split(key, 10)

    def lin(k, shape):
        return jax.random.normal(k, shape, dtype=jnp.float32) * 0.02

    def attn_params(k0, k1, k2, k3, k4):
        return {
            "wq": lin(k0, (C, C)),           # to_q (no bias), stored as (in, out)
            "wk": lin(k1, (C, C)),           # to_k (no bias)
            "wv": lin(k2, (C, C)),           # to_v (no bias)
            "wo": lin(k3, (C, C)),           # to_out[0] weight
            "bo": lin(k4, (1, C)),           # to_out[0] bias
        }

    return {
        "num_heads": num_heads,
        "norm_eps": 1e-5,
        "attn1": attn_params(*ks[0:5]),
        "attn2": attn_params(*ks[5:10]),
        "ln_gamma": jnp.ones((1, C), jnp.float32),   # LayerNorm default init
        "ln_beta": jnp.zeros((1, C), jnp.float32),
        # zero_module(nn.Conv2d(C, C, 3, padding=1)) -> all zeros (HWIO layout)
        "conv_w": jnp.zeros((3, 3, C, C), jnp.float32),
        "conv_b": jnp.zeros((1, C), jnp.float32),
        # TODO(synk): time_emb_proj (Linear(1280, C)) is unused in forward; omitted.
    }


if __name__ == "__main__":
    B, C, H, W = 2, 32, 8, 8
    num_heads = 2
    num_frames = 2            # ref_stats batch 1 -> repeat_interleave to B

    key = jax.random.PRNGKey(0)
    k_hs, k_ref, k_par, k_cw, k_cb = jax.random.split(key, 5)
    hidden_states = jax.random.normal(k_hs, (B, C, H, W), dtype=jnp.float32)
    ref_stats = jax.random.normal(k_ref, (1, C, H, W), dtype=jnp.float32)
    params = make_params(k_par, C, num_heads)

    # 1) fused LN + attention kernel (bf16 MXU operands) vs plain-JAX f32 ref
    prim_t = jax.random.normal(jax.random.PRNGKey(1), (B * H, W, C), jnp.float32)
    ref_t = jax.random.normal(jax.random.PRNGKey(2), (B * H, W, C), jnp.float32)
    pos = get_posembed_linear(2 * W, C)
    a = params["attn1"]
    got = ln_attention(prim_t, ref_t, pos[:W], pos[W:],
                       a["wq"], a["wk"], a["wv"], a["wo"], a["bo"],
                       params["ln_gamma"], params["ln_beta"],
                       num_heads=num_heads, eps=params["norm_eps"])
    want = _ln_attention_ref(prim_t, ref_t, pos, a["wq"], a["wk"], a["wv"],
                             a["wo"], a["bo"], params["ln_gamma"],
                             params["ln_beta"], num_heads=num_heads,
                             eps=params["norm_eps"])
    assert got.shape == want.shape
    assert jnp.allclose(got, want, atol=2e-2, rtol=2e-2), "attention mismatch"

    # 2) 3x3 conv kernel vs lax.conv (bf16 operands, f32 accumulation)
    cw = jax.random.normal(k_cw, (3, 3, C, C), jnp.float32) * 0.05
    cb = jax.random.normal(k_cb, (1, C), jnp.float32) * 0.05
    x_nhwc = jnp.transpose(hidden_states, (0, 2, 3, 1))
    conv_got = conv2d_3x3(x_nhwc, cw, cb)
    conv_want = jax.lax.conv_general_dilated(
        x_nhwc, cw, window_strides=(1, 1), padding="SAME",
        dimension_numbers=("NHWC", "HWIO", "NHWC")) + cb
    assert jnp.allclose(conv_got, conv_want, atol=2e-2, rtol=2e-2), "conv mismatch"

    # 3) full forward: proj is zero-initialised, so output == hidden_states.
    out = sk_reference_attention_v5(hidden_states, ref_stats, num_frames, params)
    out = jax.block_until_ready(out)
    assert out.shape == hidden_states.shape
    assert jnp.allclose(out, hidden_states, atol=1e-6), "residual mismatch"
    print("KERNEL_OK")
</pallas_src>

<mosaic_0001>
module attributes {stable_mosaic.version = 11 : i64} {
  func.func @_ln_attn_kernel(%arg0: i32, %arg1: memref<8x8x32xf32, #tpu.memory_space<vmem>>, %arg2: memref<8x8x32xf32, #tpu.memory_space<vmem>>, %arg3: memref<8x32xf32, #tpu.memory_space<vmem>>, %arg4: memref<8x32xf32, #tpu.memory_space<vmem>>, %arg5: memref<32x32xbf16, #tpu.memory_space<vmem>>, %arg6: memref<32x32xbf16, #tpu.memory_space<vmem>>, %arg7: memref<32x32xbf16, #tpu.memory_space<vmem>>, %arg8: memref<32x32xbf16, #tpu.memory_space<vmem>>, %arg9: memref<1x32xf32, #tpu.memory_space<vmem>>, %arg10: memref<1x32xf32, #tpu.memory_space<vmem>>, %arg11: memref<1x32xf32, #tpu.memory_space<vmem>>, %arg12: memref<8x8x32xf32, #tpu.memory_space<vmem>>) attributes {dimension_semantics = [#tpu.dimension_semantics<parallel>], iteration_bounds = array<i64: 2>, scalar_prefetch = 0 : i64, scratch_operands = 0 : i64, tpu.core_type = #tpu.core_type<tc>, window_params = [{transform_indices = @transform_0, window_bounds = array<i64: 8, 8, 32>}, {transform_indices = @transform_1, window_bounds = array<i64: 8, 8, 32>}, {pipeline_mode = #tpu.pipeline_mode<synchronous>, transform_indices = @transform_2, window_bounds = array<i64: 8, 32>}, {pipeline_mode = #tpu.pipeline_mode<synchronous>, transform_indices = @transform_3, window_bounds = array<i64: 8, 32>}, {pipeline_mode = #tpu.pipeline_mode<synchronous>, transform_indices = @transform_4, window_bounds = array<i64: 32, 32>}, {pipeline_mode = #tpu.pipeline_mode<synchronous>, transform_indices = @transform_5, window_bounds = array<i64: 32, 32>}, {pipeline_mode = #tpu.pipeline_mode<synchronous>, transform_indices = @transform_6, window_bounds = array<i64: 32, 32>}, {pipeline_mode = #tpu.pipeline_mode<synchronous>, transform_indices = @transform_7, window_bounds = array<i64: 32, 32>}, {pipeline_mode = #tpu.pipeline_mode<synchronous>, transform_indices = @transform_8, window_bounds = array<i64: 1, 32>}, {pipeline_mode = #tpu.pipeline_mode<synchronous>, transform_indices = @transform_9, window_bounds = array<i64: 1, 32>}, {pipeline_mode = #tpu.pipeline_mode<synchronous>, transform_indices = @transform_10, window_bounds = array<i64: 1, 32>}, {transform_indices = @transform_11, window_bounds = array<i64: 8, 8, 32>}]} {
    %c0 = arith.constant 0 : index
    %c0_0 = arith.constant 0 : index
    %0 = vector.load %arg10[%c0, %c0_0] : memref<1x32xf32, #tpu.memory_space<vmem>>, vector<1x32xf32>
    %c0_1 = arith.constant 0 : index
    %c0_2 = arith.constant 0 : index
    %1 = vector.load %arg11[%c0_1, %c0_2] : memref<1x32xf32, #tpu.memory_space<vmem>>, vector<1x32xf32>
    %c0_3 = arith.constant 0 : index
    %c0_4 = arith.constant 0 : index
    %c0_5 = arith.constant 0 : index
    %2 = vector.load %arg1[%c0_3, %c0_4, %c0_5] : memref<8x8x32xf32, #tpu.memory_space<vmem>>, vector<8x8x32xf32>
    %c0_6 = arith.constant 0 : index
    %c0_7 = arith.constant 0 : index
    %3 = vector.load %arg3[%c0_6, %c0_7] : memref<8x32xf32, #tpu.memory_space<vmem>>, vector<8x32xf32>
    %4 = vector.shape_cast %3 : vector<8x32xf32> to vector<1x8x32xf32>
    %5 = vector.broadcast %4 : vector<1x8x32xf32> to vector<8x8x32xf32>
    %6 = arith.addf %2, %5 : vector<8x8x32xf32>
    %c0_8 = arith.constant 0 : index
    %c0_9 = arith.constant 0 : index
    %c0_10 = arith.constant 0 : index
    %7 = vector.load %arg2[%c0_8, %c0_9, %c0_10] : memref<8x8x32xf32, #tpu.memory_space<vmem>>, vector<8x8x32xf32>
    %c0_11 = arith.constant 0 : index
    %c0_12 = arith.constant 0 : index
    %8 = vector.load %arg4[%c0_11, %c0_12] : memref<8x32xf32, #tpu.memory_space<vmem>>, vector<8x32xf32>
    %9 = vector.shape_cast %8 : vector<8x32xf32> to vector<1x8x32xf32>
    %10 = vector.broadcast %9 : vector<1x8x32xf32> to vector<8x8x32xf32>
    %11 = arith.addf %7, %10 : vector<8x8x32xf32>
    %cst = arith.constant dense<0.000000e+00> : vector<8x8xf32>
    %12 = vector.multi_reduction <add>, %6, %cst [2] : vector<8x8x32xf32> to vector<8x8xf32>
    %13 = vector.shape_cast %12 : vector<8x8xf32> to vector<8x8x1xf32>
    %cst_13 = arith.constant 3.200000e+01 : f32
    %14 = vector.broadcast %cst_13 : f32 to vector<8x8x1xf32>
    %15 = arith.divf %13, %14 : vector<8x8x1xf32>
    %16 = vector.broadcast %15 : vector<8x8x1xf32> to vector<8x8x32xf32>
    %17 = arith.subf %6, %16 : vector<8x8x32xf32>
    %18 = arith.mulf %17, %17 : vector<8x8x32xf32>
    %cst_14 = arith.constant dense<0.000000e+00> : vector<8x8xf32>
    %19 = vector.multi_reduction <add>, %18, %cst_14 [2] : vector<8x8x32xf32> to vector<8x8xf32>
    %20 = vector.shape_cast %19 : vector<8x8xf32> to vector<8x8x1xf32>
    %cst_15 = arith.constant 3.200000e+01 : f32
    %21 = vector.broadcast %cst_15 : f32 to vector<8x8x1xf32>
    %22 = arith.divf %20, %21 : vector<8x8x1xf32>
    %23 = vector.broadcast %15 : vector<8x8x1xf32> to vector<8x8x32xf32>
    %24 = arith.subf %6, %23 : vector<8x8x32xf32>
    %cst_16 = arith.constant 9.99999974E-6 : f32
    %25 = vector.broadcast %cst_16 : f32 to vector<8x8x1xf32>
    %26 = arith.addf %22, %25 : vector<8x8x1xf32>
    %27 = math.rsqrt %26 : vector<8x8x1xf32>
    %28 = vector.broadcast %27 : vector<8x8x1xf32> to vector<8x8x32xf32>
    %29 = arith.mulf %24, %28 : vector<8x8x32xf32>
    %30 = vector.shape_cast %0 : vector<1x32xf32> to vector<1x1x32xf32>
    %31 = vector.broadcast %30 : vector<1x1x32xf32> to vector<8x8x32xf32>
    %32 = arith.mulf %29, %31 : vector<8x8x32xf32>
    %33 = vector.shape_cast %1 : vector<1x32xf32> to vector<1x1x32xf32>
    %34 = vector.broadcast %33 : vector<1x1x32xf32> to vector<8x8x32xf32>
    %35 = arith.addf %32, %34 : vector<8x8x32xf32>
    %cst_17 = arith.constant dense<0.000000e+00> : vector<8x8xf32>
    %36 = vector.multi_reduction <add>, %11, %cst_17 [2] : vector<8x8x32xf32> to vector<8x8xf32>
    %37 = vector.shape_cast %36 : vector<8x8xf32> to vector<8x8x1xf32>
    %cst_18 = arith.constant 3.200000e+01 : f32
    %38 = vector.broadcast %cst_18 : f32 to vector<8x8x1xf32>
    %39 = arith.divf %37, %38 : vector<8x8x1xf32>
    %40 = vector.broadcast %39 : vector<8x8x1xf32> to vector<8x8x32xf32>
    %41 = arith.subf %11, %40 : vector<8x8x32xf32>
    %42 = arith.mulf %41, %41 : vector<8x8x32xf32>
    %cst_19 = arith.constant dense<0.000000e+00> : vector<8x8xf32>
    %43 = vector.multi_reduction <add>, %42, %cst_19 [2] : vector<8x8x32xf32> to vector<8x8xf32>
    %44 = vector.shape_cast %43 : vector<8x8xf32> to vector<8x8x1xf32>
    %cst_20 = arith.constant 3.200000e+01 : f32
    %45 = vector.broadcast %cst_20 : f32 to vector<8x8x1xf32>
    %46 = arith.divf %44, %45 : vector<8x8x1xf32>
    %47 = vector.broadcast %39 : vector<8x8x1xf32> to vector<8x8x32xf32>
    %48 = arith.subf %11, %47 : vector<8x8x32xf32>
    %cst_21 = arith.constant 9.99999974E-6 : f32
    %49 = vector.broadcast %cst_21 : f32 to vector<8x8x1xf32>
    %50 = arith.addf %46, %49 : vector<8x8x1xf32>
    %51 = math.rsqrt %50 : vector<8x8x1xf32>
    %52 = vector.broadcast %51 : vector<8x8x1xf32> to vector<8x8x32xf32>
    %53 = arith.mulf %48, %52 : vector<8x8x32xf32>
    %54 = vector.shape_cast %0 : vector<1x32xf32> to vector<1x1x32xf32>
    %55 = vector.broadcast %54 : vector<1x1x32xf32> to vector<8x8x32xf32>
    %56 = arith.mulf %53, %55 : vector<8x8x32xf32>
    %57 = vector.shape_cast %1 : vector<1x32xf32> to vector<1x1x32xf32>
    %58 = vector.broadcast %57 : vector<1x1x32xf32> to vector<8x8x32xf32>
    %59 = arith.addf %56, %58 : vector<8x8x32xf32>
    %60 = vector.shape_cast %35 : vector<8x8x32xf32> to vector<64x32xf32>
    %61 = arith.truncf %60 : vector<64x32xf32> to vector<64x32xbf16>
    %62 = tpu.concatenate %35, %59 in 1 : vector<8x8x32xf32>, vector<8x8x32xf32> -> vector<8x16x32xf32>
    %63 = vector.shape_cast %62 : vector<8x16x32xf32> to vector<128x32xf32>
    %64 = arith.truncf %63 : vector<128x32xf32> to vector<128x32xbf16>
    %c0_22 = arith.constant 0 : index
    %c0_23 = arith.constant 0 : index
    %65 = vector.load %arg5[%c0_22, %c0_23] : memref<32x32xbf16, #tpu.memory_space<vmem>>, vector<32x32xbf16>
    %cst_24 = arith.constant dense<0.000000e+00> : vector<64x32xf32>
    %66 = tpu.matmul %61, %65, %cst_24 {dimension_numbers = #tpu.dot_dimension_numbers<[1], [0], [0], [1], [0, 0, 1, 1], [], []>} : vector<64x32xbf16>, vector<32x32xbf16>, vector<64x32xf32> -> vector<64x32xf32>
    %c0_25 = arith.constant 0 : index
    %c0_26 = arith.constant 0 : index
    %67 = vector.load %arg6[%c0_25, %c0_26] : memref<32x32xbf16, #tpu.memory_space<vmem>>, vector<32x32xbf16>
    %cst_27 = arith.constant dense<0.000000e+00> : vector<128x32xf32>
    %68 = tpu.matmul %64, %67, %cst_27 {dimension_numbers = #tpu.dot_dimension_numbers<[1], [0], [0], [1], [0, 0, 1, 1], [], []>} : vector<128x32xbf16>, vector<32x32xbf16>, vector<128x32xf32> -> vector<128x32xf32>
    %c0_28 = arith.constant 0 : index
    %c0_29 = arith.constant 0 : index
    %69 = vector.load %arg7[%c0_28, %c0_29] : memref<32x32xbf16, #tpu.memory_space<vmem>>, vector<32x32xbf16>
    %cst_30 = arith.constant dense<0.000000e+00> : vector<128x32xf32>
    %70 = tpu.matmul %64, %69, %cst_30 {dimension_numbers = #tpu.dot_dimension_numbers<[1], [0], [0], [1], [0, 0, 1, 1], [], []>} : vector<128x32xbf16>, vector<32x32xbf16>, vector<128x32xf32> -> vector<128x32xf32>
    %71 = vector.shape_cast %66 : vector<64x32xf32> to vector<8x8x32xf32>
    %72 = vector.shape_cast %68 : vector<128x32xf32> to vector<8x16x32xf32>
    %73 = vector.shape_cast %70 : vector<128x32xf32> to vector<8x16x32xf32>
    %74 = vector.extract_strided_slice %71 {offsets = [0, 0, 0], sizes = [8, 8, 16], strides = [1, 1, 1]} : vector<8x8x32xf32> to vector<8x8x16xf32>
    %75 = arith.truncf %74 : vector<8x8x16xf32> to vector<8x8x16xbf16>
    %76 = vector.extract_strided_slice %72 {offsets = [0, 0, 0], sizes = [8, 16, 16], strides = [1, 1, 1]} : vector<8x16x32xf32> to vector<8x16x16xf32>
    %77 = arith.truncf %76 : vector<8x16x16xf32> to vector<8x16x16xbf16>
    %78 = vector.extract_strided_slice %73 {offsets = [0, 0, 0], sizes = [8, 16, 16], strides = [1, 1, 1]} : vector<8x16x32xf32> to vector<8x16x16xf32>
    %79 = arith.truncf %78 : vector<8x16x16xf32> to vector<8x16x16xbf16>
    "tpu.trace_start"() <{level = 10 : i32, message = "bqd,bkd->bqk"}> : () -> ()
    %cst_31 = arith.constant dense<0.000000e+00> : vector<8x8x16xf32>
    %80 = tpu.matmul %75, %77, %cst_31 {dimension_numbers = #tpu.dot_dimension_numbers<[2], [2], [1], [1], [0, 0, 0, 1, 1, 1], [0], [0]>} : vector<8x8x16xbf16>, vector<8x16x16xbf16>, vector<8x8x16xf32> -> vector<8x8x16xf32>
    "tpu.trace_stop"() : () -> ()
    %cst_32 = arith.constant 2.500000e-01 : f32
    %81 = vector.broadcast %cst_32 : f32 to vector<8x8x16xf32>
    %82 = arith.mulf %80, %81 : vector<8x8x16xf32>
    %cst_33 = arith.constant dense<0xFF800000> : vector<8x8xf32>
    %83 = vector.multi_reduction <maximumf>, %82, %cst_33 [2] : vector<8x8x16xf32> to vector<8x8xf32>
    %84 = vector.shape_cast %83 : vector<8x8xf32> to vector<8x8x1xf32>
    %85 = vector.broadcast %84 : vector<8x8x1xf32> to vector<8x8x16xf32>
    %86 = arith.subf %82, %85 : vector<8x8x16xf32>
    %87 = math.exp %86 : vector<8x8x16xf32>
    %cst_34 = arith.constant dense<0.000000e+00> : vector<8x8xf32>
    %88 = vector.multi_reduction <add>, %87, %cst_34 [2] : vector<8x8x16xf32> to vector<8x8xf32>
    %89 = vector.shape_cast %88 : vector<8x8xf32> to vector<8x8x1xf32>
    %90 = arith.truncf %87 : vector<8x8x16xf32> to vector<8x8x16xbf16>
    "tpu.trace_start"() <{level = 10 : i32, message = "bqk,bkd->bqd"}> : () -> ()
    %cst_35 = arith.constant dense<0.000000e+00> : vector<8x8x16xf32>
    %91 = tpu.matmul %90, %79, %cst_35 {dimension_numbers = #tpu.dot_dimension_numbers<[2], [1], [1], [2], [0, 0, 0, 1, 1, 2], [0], [0]>} : vector<8x8x16xbf16>, vector<8x16x16xbf16>, vector<8x8x16xf32> -> vector<8x8x16xf32>
    "tpu.trace_stop"() : () -> ()
    %92 = vector.broadcast %89 : vector<8x8x1xf32> to vector<8x8x16xf32>
    %93 = arith.divf %91, %92 : vector<8x8x16xf32>
    %94 = vector.extract_strided_slice %71 {offsets = [0, 0, 16], sizes = [8, 8, 16], strides = [1, 1, 1]} : vector<8x8x32xf32> to vector<8x8x16xf32>
    %95 = arith.truncf %94 : vector<8x8x16xf32> to vector<8x8x16xbf16>
    %96 = vector.extract_strided_slice %72 {offsets = [0, 0, 16], sizes = [8, 16, 16], strides = [1, 1, 1]} : vector<8x16x32xf32> to vector<8x16x16xf32>
    %97 = arith.truncf %96 : vector<8x16x16xf32> to vector<8x16x16xbf16>
    %98 = vector.extract_strided_slice %73 {offsets = [0, 0, 16], sizes = [8, 16, 16], strides = [1, 1, 1]} : vector<8x16x32xf32> to vector<8x16x16xf32>
    %99 = arith.truncf %98 : vector<8x16x16xf32> to vector<8x16x16xbf16>
    "tpu.trace_start"() <{level = 10 : i32, message = "bqd,bkd->bqk"}> : () -> ()
    %cst_36 = arith.constant dense<0.000000e+00> : vector<8x8x16xf32>
    %100 = tpu.matmul %95, %97, %cst_36 {dimension_numbers = #tpu.dot_dimension_numbers<[2], [2], [1], [1], [0, 0, 0, 1, 1, 1], [0], [0]>} : vector<8x8x16xbf16>, vector<8x16x16xbf16>, vector<8x8x16xf32> -> vector<8x8x16xf32>
    "tpu.trace_stop"() : () -> ()
    %cst_37 = arith.constant 2.500000e-01 : f32
    %101 = vector.broadcast %cst_37 : f32 to vector<8x8x16xf32>
    %102 = arith.mulf %100, %101 : vector<8x8x16xf32>
    %cst_38 = arith.constant dense<0xFF800000> : vector<8x8xf32>
    %103 = vector.multi_reduction <maximumf>, %102, %cst_38 [2] : vector<8x8x16xf32> to vector<8x8xf32>
    %104 = vector.shape_cast %103 : vector<8x8xf32> to vector<8x8x1xf32>
    %105 = vector.broadcast %104 : vector<8x8x1xf32> to vector<8x8x16xf32>
    %106 = arith.subf %102, %105 : vector<8x8x16xf32>
    %107 = math.exp %106 : vector<8x8x16xf32>
    %cst_39 = arith.constant dense<0.000000e+00> : vector<8x8xf32>
    %108 = vector.multi_reduction <add>, %107, %cst_39 [2] : vector<8x8x16xf32> to vector<8x8xf32>
    %109 = vector.shape_cast %108 : vector<8x8xf32> to vector<8x8x1xf32>
    %110 = arith.truncf %107 : vector<8x8x16xf32> to vector<8x8x16xbf16>
    "tpu.trace_start"() <{level = 10 : i32, message = "bqk,bkd->bqd"}> : () -> ()
    %cst_40 = arith.constant dense<0.000000e+00> : vector<8x8x16xf32>
    %111 = tpu.matmul %110, %99, %cst_40 {dimension_numbers = #tpu.dot_dimension_numbers<[2], [1], [1], [2], [0, 0, 0, 1, 1, 2], [0], [0]>} : vector<8x8x16xbf16>, vector<8x16x16xbf16>, vector<8x8x16xf32> -> vector<8x8x16xf32>
    "tpu.trace_stop"() : () -> ()
    %112 = vector.broadcast %109 : vector<8x8x1xf32> to vector<8x8x16xf32>
    %113 = arith.divf %111, %112 : vector<8x8x16xf32>
    %114 = tpu.concatenate %93, %113 in 2 : vector<8x8x16xf32>, vector<8x8x16xf32> -> vector<8x8x32xf32>
    %115 = vector.shape_cast %114 : vector<8x8x32xf32> to vector<64x32xf32>
    %116 = arith.truncf %115 : vector<64x32xf32> to vector<64x32xbf16>
    %c0_41 = arith.constant 0 : index
    %c0_42 = arith.constant 0 : index
    %117 = vector.load %arg8[%c0_41, %c0_42] : memref<32x32xbf16, #tpu.memory_space<vmem>>, vector<32x32xbf16>
    %cst_43 = arith.constant dense<0.000000e+00> : vector<64x32xf32>
    %118 = tpu.matmul %116, %117, %cst_43 {dimension_numbers = #tpu.dot_dimension_numbers<[1], [0], [0], [1], [0, 0, 1, 1], [], []>} : vector<64x32xbf16>, vector<32x32xbf16>, vector<64x32xf32> -> vector<64x32xf32>
    %c0_44 = arith.constant 0 : index
    %c0_45 = arith.constant 0 : index
    %119 = vector.load %arg9[%c0_44, %c0_45] : memref<1x32xf32, #tpu.memory_space<vmem>>, vector<1x32xf32>
    %120 = vector.broadcast %119 : vector<1x32xf32> to vector<64x32xf32>
    %121 = arith.addf %118, %120 : vector<64x32xf32>
    %122 = vector.shape_cast %121 : vector<64x32xf32> to vector<8x8x32xf32>
    %c0_46 = arith.constant 0 : index
    %c0_47 = arith.constant 0 : index
    %c0_48 = arith.constant 0 : index
    %123 = vector.load %arg12[%c0_46, %c0_47, %c0_48] : memref<8x8x32xf32, #tpu.memory_space<vmem>>, vector<8x8x32xf32>
    tpu.vector_store %arg12[%c0_46, %c0_47, %c0_48], %122 {strides = array<i32>} : memref<8x8x32xf32, #tpu.memory_space<vmem>>, vector<8x8x32xf32>,
    return
  }
  func.func @transform_0(%arg0: i32) -> (i32, i32, i32) {
    %c0_i32 = arith.constant 0 : i32
    %c0_i32_0 = arith.constant 0 : i32
    %c0_i32_1 = arith.constant 0 : i32
    return %arg0, %c0_i32, %c0_i32_0 : i32, i32, i32
  }
  func.func @transform_1(%arg0: i32) -> (i32, i32, i32) {
    %c0_i32 = arith.constant 0 : i32
    %c0_i32_0 = arith.constant 0 : i32
    %c0_i32_1 = arith.constant 0 : i32
    return %arg0, %c0_i32, %c0_i32_0 : i32, i32, i32
  }
  func.func @transform_2(%arg0: i32) -> (i32, i32) {
    %c0_i32 = arith.constant 0 : i32
    %c0_i32_0 = arith.constant 0 : i32
    %c0_i32_1 = arith.constant 0 : i32
    return %c0_i32, %c0_i32_0 : i32, i32
  }
  func.func @transform_3(%arg0: i32) -> (i32, i32) {
    %c0_i32 = arith.constant 0 : i32
    %c0_i32_0 = arith.constant 0 : i32
    %c0_i32_1 = arith.constant 0 : i32
    return %c0_i32, %c0_i32_0 : i32, i32
  }
  func.func @transform_4(%arg0: i32) -> (i32, i32) {
    %c0_i32 = arith.constant 0 : i32
    %c0_i32_0 = arith.constant 0 : i32
    %c0_i32_1 = arith.constant 0 : i32
    return %c0_i32, %c0_i32_0 : i32, i32
  }
  func.func @transform_5(%arg0: i32) -> (i32, i32) {
    %c0_i32 = arith.constant 0 : i32
    %c0_i32_0 = arith.constant 0 : i32
    %c0_i32_1 = arith.constant 0 : i32
    return %c0_i32, %c0_i32_0 : i32, i32
  }
  func.func @transform_6(%arg0: i32) -> (i32, i32) {
    %c0_i32 = arith.constant 0 : i32
    %c0_i32_0 = arith.constant 0 : i32
    %c0_i32_1 = arith.constant 0 : i32
    return %c0_i32, %c0_i32_0 : i32, i32
  }
  func.func @transform_7(%arg0: i32) -> (i32, i32) {
    %c0_i32 = arith.constant 0 : i32
    %c0_i32_0 = arith.constant 0 : i32
    %c0_i32_1 = arith.constant 0 : i32
    return %c0_i32, %c0_i32_0 : i32, i32
  }
  func.func @transform_8(%arg0: i32) -> (i32, i32) {
    %c0_i32 = arith.constant 0 : i32
    %c0_i32_0 = arith.constant 0 : i32
    %c0_i32_1 = arith.constant 0 : i32
    return %c0_i32, %c0_i32_0 : i32, i32
  }
  func.func @transform_9(%arg0: i32) -> (i32, i32) {
    %c0_i32 = arith.constant 0 : i32
    %c0_i32_0 = arith.constant 0 : i32
    %c0_i32_1 = arith.constant 0 : i32
    return %c0_i32, %c0_i32_0 : i32, i32
  }
  func.func @transform_10(%arg0: i32) -> (i32, i32) {
    %c0_i32 = arith.constant 0 : i32
    %c0_i32_0 = arith.constant 0 : i32
    %c0_i32_1 = arith.constant 0 : i32
    return %c0_i32, %c0_i32_0 : i32, i32
  }
  func.func @transform_11(%arg0: i32) -> (i32, i32, i32) {
    %c0_i32 = arith.constant 0 : i32
    %c0_i32_0 = arith.constant 0 : i32
    %c0_i32_1 = arith.constant 0 : i32
    return %arg0, %c0_i32, %c0_i32_0 : i32, i32, i32
  }
}

</mosaic_0001>

<llo_original>
// kernel: tpu_custom_call.1
$region0: #{tpu_custom_call.1}
  #allocation0 [shape = 'u32[]', space=smem, size = 0x4, offset = 0x4, fixed_abs, tag = 'smem constant byte address 0x4 - core index']
  #allocation1 [shape = 'u32[72,128]{1,0:T(1,128)}', space=vmem, size = 0x9000, scoped, tag = 'internal scratch']
  %s0 = inlined_call_operand.hbm [shape: f32[16,8,32], index: 0, kind: input, shape index: {}]
  %s1 = inlined_call_operand.hbm [shape: f32[16,8,32], index: 1, kind: input, shape index: {}]
  %s2 = inlined_call_operand.hbm [shape: f32[8,32], index: 2, kind: input, shape index: {}]
  %s3 = inlined_call_operand.hbm [shape: f32[8,32], index: 3, kind: input, shape index: {}]
  %s4 = inlined_call_operand.hbm [shape: bf16[32,32], index: 4, kind: input, shape index: {}]
  %s5 = inlined_call_operand.hbm [shape: bf16[32,32], index: 5, kind: input, shape index: {}]
  %s6 = inlined_call_operand.hbm [shape: bf16[32,32], index: 6, kind: input, shape index: {}]
  %s7 = inlined_call_operand.hbm [shape: bf16[32,32], index: 7, kind: input, shape index: {}]
  %s8 = inlined_call_operand.vmem [shape: f32[1,32], index: 8, kind: input, shape index: {}]
  %s9 = inlined_call_operand.vmem [shape: f32[1,32], index: 9, kind: input, shape index: {}]
  %s10 = inlined_call_operand.vmem [shape: f32[1,32], index: 10, kind: input, shape index: {}]
  %s11 = inlined_call_operand.hbm [shape: f32[16,8,32], index: 11, kind: output, shape index: {}]
  %s12 = sld [smem:[#allocation0]]
  $region109: #{tpu_custom_call.1} parent=0
    _
  %s14 = ssub.s32 1, %s12
  %s15 = scalar_select 0, %s14, %s12
  $region1: #{tpu_custom_call.1} parent=0
    #allocation2 [shape = 'u8[65536]{0}', space=vmem, size = 0x10000, scoped, tag = 'input window, operand 0']
    #allocation3 [shape = 's32[2]{0}', space=sflag, size = 0x8, scoped, tag = 'scoped memory for tpu_custom_call.1']
    #allocation4 [shape = 's32[2]{0}', space=sflag, size = 0x8, scoped, tag = 'scoped memory for tpu_custom_call.1']
    #allocation5 [shape = 'u8[65536]{0}', space=vmem, size = 0x10000, scoped, tag = 'input window, operand 1']
    #allocation6 [shape = 's32[2]{0}', space=sflag, size = 0x8, scoped, tag = 'scoped memory for tpu_custom_call.1']
    #allocation7 [shape = 'u8[4096]{0}', space=vmem, size = 0x1000, scoped, tag = 'input window, operand 2, single buffered']
    #allocation8 [shape = 'u8[4096]{0}', space=vmem, size = 0x1000, scoped, tag = 'input window, operand 3, single buffered']
    #allocation9 [shape = 's32[1]{0}', space=sflag, size = 0x4, scoped, tag = 'scoped memory for tpu_custom_call.1']
    #allocation10 [shape = 'u8[8192]{0}', space=vmem, size = 0x2000, scoped, tag = 'input window, operand 4, single buffered']
    #allocation11 [shape = 'u8[8192]{0}', space=vmem, size = 0x2000, scoped, tag = 'input window, operand 5, single buffered']
    #allocation12 [shape = 's32[1]{0}', space=sflag, size = 0x4, scoped, tag = 'scoped memory for tpu_custom_call.1']
    #allocation13 [shape = 'u8[8192]{0}', space=vmem, size = 0x2000, scoped, tag = 'input window, operand 6, single buffered']
    #allocation14 [shape = 'u8[8192]{0}', space=vmem, size = 0x2000, scoped, tag = 'input window, operand 7, single buffered']
    #allocation15 [shape = 's32[1]{0}', space=sflag, size = 0x4, scoped, tag = 'scoped memory for tpu_custom_call.1']
    #allocation16 [shape = 'u8[65536]{0}', space=vmem, size = 0x10000, scoped, tag = 'output window, operand 0']
    %16 = vsyncpa [#allocation3], 0
    %s17 = scalar_lea.sflag [#allocation3], 1
    %18 = vsyncpa %s17, 0
    %19 = vsyncpa [#allocation6], 0
    %s20 = scalar_lea.sflag [#allocation6], 1
    %21 = vsyncpa %s20, 0
    %22 = vsyncpa [#allocation9], 0
    %23 = vsyncpa [#allocation12], 0
    %24 = vsyncpa [#allocation15], 0
    %25 = vsyncpa [#allocation4], 0
    %s26 = scalar_lea.sflag [#allocation4], 1
    %27 = vsyncpa %s26, 0
    loop: start=0, step=1, limit=4
    $region2: #{tpu_custom_call.1} parent=1 // loop_pre_header
      _
    $region3: #{tpu_custom_call.1} parent=1 // loop_header
      %s29 = sphi 0, %s33
      %p30 = scmp.ge.s32.totalorder %s29, 4
      %s39 = sphi 0, %s41
      %s42 = sphi 0, %s39
      %s43 = sphi 0, %s42
      %s59 = sphi 0, %s43
      %s65 = sphi 0, %s67
      %s68 = sphi 0, %s65
      %s69 = sphi 0, %s68
      %s85 = sphi 0, %s69
      %s89 = sphi 0, %s89
      %s91 = sphi 0, %s89
      %s92 = sphi 0, %s91
      %s106 = sphi 0, %s92
      %s110 = sphi 0, %s110
      %s112 = sphi 0, %s110
      %s113 = sphi 0, %s112
      %s127 = sphi 0, %s113
      %s131 = sphi 0, %s131
      %s133 = sphi 0, %s131
      %s134 = sphi 0, %s133
      %s148 = sphi 0, %s134
      %s152 = sphi 0, %s152
      %s154 = sphi 0, %s152
      %s155 = sphi 0, %s154
      %s169 = sphi 0, %s155
      %s173 = sphi 0, %s173
      %s175 = sphi 0, %s173
      %s176 = sphi 0, %s175
      %s190 = sphi 0, %s176
      %s194 = sphi 0, %s194
      %s196 = sphi 0, %s194
      %s197 = sphi 0, %s196
      %s211 = sphi 0, %s197
      %s215 = sphi 0, %s215
      %s217 = sphi 0, %s215
      %s218 = sphi 0, %s217
      %s232 = sphi 0, %s218
      %s236 = sphi 0, %s236
      %s238 = sphi 0, %s236
      %s239 = sphi 0, %s238
      %s253 = sphi 0, %s239
      %s257 = sphi 0, %s257
      %s259 = sphi 0, %s257
      %s260 = sphi 0, %s259
      %s274 = sphi 0, %s260
      %s280 = sphi 0, %s282
      %s283 = sphi 0, %s280
      %s284 = sphi 0, %s283
      %s300 = sphi 0, %s284
    $region4: #{tpu_custom_call.1} parent=1 // loop_header_branch
      %32 = sbr.rel (%p30) target = $region8
    $region5: #{tpu_custom_call.1} parent=1 // loop_body
      %s34 = ssub.s32 %s29, 1
      %s35 = ssub.s32 %s29, 2
      %s36 = sadd.s32 %s29, 1
      %s37 = ssub.s32 %s29, %s36
      %p38 = scmp.eq.s32.totalorder %s37, 0
      %s40 = sadd.s32 %s39, 1
      %s41 = scalar_select %p38, %s39, %s40
      %p44 = pneg %p38
      %p45 = scmp.eq.s32.totalorder %s29, 1
      %p46 = por %p44, %p45
      %p47 = scmp.ne.s32.totalorder %s39, %s42
      %p48 = scmp.eq.s32.totalorder %s29, 0
      %p49 = por %p47, %p48
      %p50 = scmp.ne.s32.totalorder %s39, %s42
      %p51 = scmp.eq.s32.totalorder %s34, 1
      %p52 = por %p50, %p51
      %p53 = scmp.ne.s32.totalorder %s42, %s43
      %p54 = scmp.eq.s32.totalorder %s34, 0
      %p55 = por %p53, %p54
      %p56 = scmp.ne.s32.totalorder %s42, %s43
      %p57 = scmp.eq.s32.totalorder %s35, 1
      %p58 = por %p56, %p57
      %p60 = scmp.ne.s32.totalorder %s43, %s59
      %p61 = scmp.eq.s32.totalorder %s35, 0
      %p62 = por %p60, %p61
      %s63 = ssub.s32 %s29, %s36
      %p64 = scmp.eq.s32.totalorder %s63, 0
      %s66 = sadd.s32 %s65, 1
      %s67 = scalar_select %p64, %s65, %s66
      %p70 = pneg %p64
      %p71 = scmp.eq.s32.totalorder %s29, 1
      %p72 = por %p70, %p71
      %p73 = scmp.ne.s32.totalorder %s65, %s68
      %p74 = scmp.eq.s32.totalorder %s29, 0
      %p75 = por %p73, %p74
      %p76 = scmp.ne.s32.totalorder %s65, %s68
      %p77 = scmp.eq.s32.totalorder %s34, 1
      %p78 = por %p76, %p77
      %p79 = scmp.ne.s32.totalorder %s68, %s69
      %p80 = scmp.eq.s32.totalorder %s34, 0
      %p81 = por %p79, %p80
      %p82 = scmp.ne.s32.totalorder %s68, %s69
      %p83 = scmp.eq.s32.totalorder %s35, 1
      %p84 = por %p82, %p83
      %p86 = scmp.ne.s32.totalorder %s69, %s85
      %p87 = scmp.eq.s32.totalorder %s35, 0
      %p88 = por %p86, %p87
      %s90 = sadd.s32 %s89, 1
      %p93 = scmp.eq.s32.totalorder %s29, 1
      %p94 = scmp.ne.s32.totalorder %s89, %s91
      %p95 = scmp.eq.s32.totalorder %s29, 0
      %p96 = por %p94, %p95
      %p97 = scmp.ne.s32.totalorder %s89, %s91
      %p98 = scmp.eq.s32.totalorder %s34, 1
      %p99 = por %p97, %p98
      %p100 = scmp.ne.s32.totalorder %s91, %s92
      %p101 = scmp.eq.s32.totalorder %s34, 0
      %p102 = por %p100, %p101
      %p103 = scmp.ne.s32.totalorder %s91, %s92
      %p104 = scmp.eq.s32.totalorder %s35, 1
      %p105 = por %p103, %p104
      %p107 = scmp.ne.s32.totalorder %s92, %s106
      %p108 = scmp.eq.s32.totalorder %s35, 0
      %p109 = por %p107, %p108
      %s111 = sadd.s32 %s110, 1
      %p114 = scmp.eq.s32.totalorder %s29, 1
      %p115 = scmp.ne.s32.totalorder %s110, %s112
      %p116 = scmp.eq.s32.totalorder %s29, 0
      %p117 = por %p115, %p116
      %p118 = scmp.ne.s32.totalorder %s110, %s112
      %p119 = scmp.eq.s32.totalorder %s34, 1
      %p120 = por %p118, %p119
      %p121 = scmp.ne.s32.totalorder %s112, %s113
      %p122 = scmp.eq.s32.totalorder %s34, 0
      %p123 = por %p121, %p122
      %p124 = scmp.ne.s32.totalorder %s112, %s113
      %p125 = scmp.eq.s32.totalorder %s35, 1
      %p126 = por %p124, %p125
      %p128 = scmp.ne.s32.totalorder %s113, %s127
      %p129 = scmp.eq.s32.totalorder %s35, 0
      %p130 = por %p128, %p129
      %s132 = sadd.s32 %s131, 1
      %p135 = scmp.eq.s32.totalorder %s29, 1
      %p136 = scmp.ne.s32.totalorder %s131, %s133
      %p137 = scmp.eq.s32.totalorder %s29, 0
      %p138 = por %p136, %p137
      %p139 = scmp.ne.s32.totalorder %s131, %s133
      %p140 = scmp.eq.s32.totalorder %s34, 1
      %p141 = por %p139, %p140
      %p142 = scmp.ne.s32.totalorder %s133, %s134
      %p143 = scmp.eq.s32.totalorder %s34, 0
      %p144 = por %p142, %p143
      %p145 = scmp.ne.s32.totalorder %s133, %s134
      %p146 = scmp.eq.s32.totalorder %s35, 1
      %p147 = por %p145, %p146
      %p149 = scmp.ne.s32.totalorder %s134, %s148
      %p150 = scmp.eq.s32.totalorder %s35, 0
      %p151 = por %p149, %p150
      %s153 = sadd.s32 %s152, 1
      %p156 = scmp.eq.s32.totalorder %s29, 1
      %p157 = scmp.ne.s32.totalorder %s152, %s154
      %p158 = scmp.eq.s32.totalorder %s29, 0
      %p159 = por %p157, %p158
      %p160 = scmp.ne.s32.totalorder %s152, %s154
      %p161 = scmp.eq.s32.totalorder %s34, 1
      %p162 = por %p160, %p161
      %p163 = scmp.ne.s32.totalorder %s154, %s155
      %p164 = scmp.eq.s32.totalorder %s34, 0
      %p165 = por %p163, %p164
      %p166 = scmp.ne.s32.totalorder %s154, %s155
      %p167 = scmp.eq.s32.totalorder %s35, 1
      %p168 = por %p166, %p167
      %p170 = scmp.ne.s32.totalorder %s155, %s169
      %p171 = scmp.eq.s32.totalorder %s35, 0
      %p172 = por %p170, %p171
      %s174 = sadd.s32 %s173, 1
      %p177 = scmp.eq.s32.totalorder %s29, 1
      %p178 = scmp.ne.s32.totalorder %s173, %s175
      %p179 = scmp.eq.s32.totalorder %s29, 0
      %p180 = por %p178, %p179
      %p181 = scmp.ne.s32.totalorder %s173, %s175
      %p182 = scmp.eq.s32.totalorder %s34, 1
      %p183 = por %p181, %p182
      %p184 = scmp.ne.s32.totalorder %s175, %s176
      %p185 = scmp.eq.s32.totalorder %s34, 0
      %p186 = por %p184, %p185
      %p187 = scmp.ne.s32.totalorder %s175, %s176
      %p188 = scmp.eq.s32.totalorder %s35, 1
      %p189 = por %p187, %p188
      %p191 = scmp.ne.s32.totalorder %s176, %s190
      %p192 = scmp.eq.s32.totalorder %s35, 0
      %p193 = por %p191, %p192
      %s195 = sadd.s32 %s194, 1
      %p198 = scmp.eq.s32.totalorder %s29, 1
      %p199 = scmp.ne.s32.totalorder %s194, %s196
      %p200 = scmp.eq.s32.totalorder %s29, 0
      %p201 = por %p199, %p200
      %p202 = scmp.ne.s32.totalorder %s194, %s196
      %p203 = scmp.eq.s32.totalorder %s34, 1
      %p204 = por %p202, %p203
      %p205 = scmp.ne.s32.totalorder %s196, %s197
      %p206 = scmp.eq.s32.totalorder %s34, 0
      %p207 = por %p205, %p206
      %p208 = scmp.ne.s32.totalorder %s196, %s197
      %p209 = scmp.eq.s32.totalorder %s35, 1
      %p210 = por %p208, %p209
      %p212 = scmp.ne.s32.totalorder %s197, %s211
      %p213 = scmp.eq.s32.totalorder %s35, 0
      %p214 = por %p212, %p213
      %s216 = sadd.s32 %s215, 1
      %p219 = scmp.eq.s32.totalorder %s29, 1
      %p220 = scmp.ne.s32.totalorder %s215, %s217
      %p221 = scmp.eq.s32.totalorder %s29, 0
      %p222 = por %p220, %p221
      %p223 = scmp.ne.s32.totalorder %s215, %s217
      %p224 = scmp.eq.s32.totalorder %s34, 1
      %p225 = por %p223, %p224
      %p226 = scmp.ne.s32.totalorder %s217, %s218
      %p227 = scmp.eq.s32.totalorder %s34, 0
      %p228 = por %p226, %p227
      %p229 = scmp.ne.s32.totalorder %s217, %s218
      %p230 = scmp.eq.s32.totalorder %s35, 1
      %p231 = por %p229, %p230
      %p233 = scmp.ne.s32.totalorder %s218, %s232
      %p234 = scmp.eq.s32.totalorder %s35, 0
      %p235 = por %p233, %p234
      %s237 = sadd.s32 %s236, 1
      %p240 = scmp.eq.s32.totalorder %s29, 1
      %p241 = scmp.ne.s32.totalorder %s236, %s238
      %p242 = scmp.eq.s32.totalorder %s29, 0
      %p243 = por %p241, %p242
      %p244 = scmp.ne.s32.totalorder %s236, %s238
      %p245 = scmp.eq.s32.totalorder %s34, 1
      %p246 = por %p244, %p245
      %p247 = scmp.ne.s32.totalorder %s238, %s239
      %p248 = scmp.eq.s32.totalorder %s34, 0
      %p249 = por %p247, %p248
      %p250 = scmp.ne.s32.totalorder %s238, %s239
      %p251 = scmp.eq.s32.totalorder %s35, 1
      %p252 = por %p250, %p251
      %p254 = scmp.ne.s32.totalorder %s239, %s253
      %p255 = scmp.eq.s32.totalorder %s35, 0
      %p256 = por %p254, %p255
      %s258 = sadd.s32 %s257, 1
      %p261 = scmp.eq.s32.totalorder %s29, 1
      %p262 = scmp.ne.s32.totalorder %s257, %s259
      %p263 = scmp.eq.s32.totalorder %s29, 0
      %p264 = por %p262, %p263
      %p265 = scmp.ne.s32.totalorder %s257, %s259
      %p266 = scmp.eq.s32.totalorder %s34, 1
      %p267 = por %p265, %p266
      %p268 = scmp.ne.s32.totalorder %s259, %s260
      %p269 = scmp.eq.s32.totalorder %s34, 0
      %p270 = por %p268, %p269
      %p271 = scmp.ne.s32.totalorder %s259, %s260
      %p272 = scmp.eq.s32.totalorder %s35, 1
      %p273 = por %p271, %p272
      %p275 = scmp.ne.s32.totalorder %s260, %s274
      %p276 = scmp.eq.s32.totalorder %s35, 0
      %p277 = por %p275, %p276
      %s278 = ssub.s32 %s29, %s36
      %p279 = scmp.eq.s32.totalorder %s278, 0
      %s281 = sadd.s32 %s280, 1
      %s282 = scalar_select %p279, %s280, %s281
      %p285 = pneg %p279
      %p286 = scmp.eq.s32.totalorder %s29, 1
      %p287 = por %p285, %p286
      %p288 = scmp.ne.s32.totalorder %s280, %s283
      %p289 = scmp.eq.s32.totalorder %s29, 0
      %p290 = por %p288, %p289
      %p291 = scmp.ne.s32.totalorder %s280, %s283
      %p292 = scmp.eq.s32.totalorder %s34, 1
      %p293 = por %p291, %p292
      %p294 = scmp.ne.s32.totalorder %s283, %s284
      %p295 = scmp.eq.s32.totalorder %s34, 0
      %p296 = por %p294, %p295
      %p297 = scmp.ne.s32.totalorder %s283, %s284
      %p298 = scmp.eq.s32.totalorder %s35, 1
      %p299 = por %p297, %p298
      %p301 = scmp.ne.s32.totalorder %s284, %s300
      %p302 = scmp.eq.s32.totalorder %s35, 0
      %p303 = por %p301, %p302
      %p304 = scmp.le.s32.totalorder 1, %s29
      %p305 = scmp.lt.s32.totalorder %s29, 3
      %p306 = pnand %p304, %p305
      %p307 = pneg %p306
      // Predicated region
      $region9: #{tpu_custom_call.1} parent=5 // pred_check
        _
      $region10: #{tpu_custom_call.1} parent=5 // pred_check_branch
        %309 = sbr.rel (%p306) target = $region12
      $region11: #{tpu_custom_call.1} parent=5 // pred_region
        %s310 = ssub.s32 %s29, 1
        // Predicated region
        $region13: #{tpu_custom_call.1} parent=11 // pred_check
          %p311 = pneg %p102
        $region14: #{tpu_custom_call.1} parent=11 // pred_check_branch
          %313 = sbr.rel (%p311) target = $region16
        $region15: #{tpu_custom_call.1} parent=11 // pred_region
          %315 = vsyncadd [#allocation6], 0
          %s317 = sshll.u32 %s2, 4
          %s318 = int_to_ptr.hbm [resolvable:$true] %s317
          %s319 = sshll.u32 [#allocation7], 4
          %s320 = int_to_ptr.vmem [resolvable:$true] %s319
          %322 = dma.hbm_to_vmem [thread:$0]  %s318, 128, %s320, [#allocation6]
        $region16: #{tpu_custom_call.1} parent=11 // pred_fallthru
          _
        // Predicated region
        $region17: #{tpu_custom_call.1} parent=11 // pred_check
          %p323 = pneg %p123
        $region18: #{tpu_custom_call.1} parent=11 // pred_check_branch
          %325 = sbr.rel (%p323) target = $region20
        $region19: #{tpu_custom_call.1} parent=11 // pred_region
          %327 = vsyncadd [#allocation9], 0
          %s329 = sshll.u32 %s3, 4
          %s330 = int_to_ptr.hbm [resolvable:$true] %s329
          %s331 = sshll.u32 [#allocation8], 4
          %s332 = int_to_ptr.vmem [resolvable:$true] %s331
          %334 = dma.hbm_to_vmem [thread:$0]  %s330, 128, %s332, [#allocation9]
        $region20: #{tpu_custom_call.1} parent=11 // pred_fallthru
          _
        // Predicated region
        $region21: #{tpu_custom_call.1} parent=11 // pred_check
          %p335 = pneg %p144
        $region22: #{tpu_custom_call.1} parent=11 // pred_check_branch
          %337 = sbr.rel (%p335) target = $region24
        $region23: #{tpu_custom_call.1} parent=11 // pred_region
          %339 = vsyncadd [#allocation9], 0
          %s340 = sshll.u32 %s4, 4
          %s341 = int_to_ptr.hbm [resolvable:$true] %s340
          %s342 = sshll.u32 [#allocation10], 4
          %s343 = int_to_ptr.vmem [resolvable:$true] %s342
          %348 = dma.hbm_to_vmem [thread:$0]  %s341, 256, %s343, [#allocation9], 64, 64, 4
        $region24: #{tpu_custom_call.1} parent=11 // pred_fallthru
          _
        // Predicated region
        $region25: #{tpu_custom_call.1} parent=11 // pred_check
          %p349 = pneg %p165
        $region26: #{tpu_custom_call.1} parent=11 // pred_check_branch
          %351 = sbr.rel (%p349) target = $region28
        $region27: #{tpu_custom_call.1} parent=11 // pred_region
          %353 = vsyncadd [#allocation12], 0
          %s354 = sshll.u32 %s5, 4
          %s355 = int_to_ptr.hbm [resolvable:$true] %s354
          %s356 = sshll.u32 [#allocation11], 4
          %s357 = int_to_ptr.vmem [resolvable:$true] %s356
          %362 = dma.hbm_to_vmem [thread:$0]  %s355, 256, %s357, [#allocation12], 64, 64, 4
        $region28: #{tpu_custom_call.1} parent=11 // pred_fallthru
          _
        // Predicated region
        $region29: #{tpu_custom_call.1} parent=11 // pred_check
          %p363 = pneg %p186
        $region30: #{tpu_custom_call.1} parent=11 // pred_check_branch
          %365 = sbr.rel (%p363) target = $region32
        $region31: #{tpu_custom_call.1} parent=11 // pred_region
          %367 = vsyncadd [#allocation12], 0
          %s368 = sshll.u32 %s6, 4
          %s369 = int_to_ptr.hbm [resolvable:$true] %s368
          %s370 = sshll.u32 [#allocation13], 4
          %s371 = int_to_ptr.vmem [resolvable:$true] %s370
          %376 = dma.hbm_to_vmem [thread:$0]  %s369, 256, %s371, [#allocation12], 64, 64, 4
        $region32: #{tpu_custom_call.1} parent=11 // pred_fallthru
          _
        // Predicated region
        $region33: #{tpu_custom_call.1} parent=11 // pred_check
          %p377 = pneg %p207
        $region34: #{tpu_custom_call.1} parent=11 // pred_check_branch
          %379 = sbr.rel (%p377) target = $region36
        $region35: #{tpu_custom_call.1} parent=11 // pred_region
          %381 = vsyncadd [#allocation15], 0
          %s382 = sshll.u32 %s7, 4
          %s383 = int_to_ptr.hbm [resolvable:$true] %s382
          %s384 = sshll.u32 [#allocation14], 4
          %s385 = int_to_ptr.vmem [resolvable:$true] %s384
          %390 = dma.hbm_to_vmem [thread:$0]  %s383, 256, %s385, [#allocation15], 64, 64, 4
        $region36: #{tpu_custom_call.1} parent=11 // pred_fallthru
          _
        // Predicated region
        $region37: #{tpu_custom_call.1} parent=11 // pred_check
          %p391 = pneg %p228
        $region38: #{tpu_custom_call.1} parent=11 // pred_check_branch
          %393 = sbr.rel (%p391) target = $region40
        $region39: #{tpu_custom_call.1} parent=11 // pred_region
          _
        $region40: #{tpu_custom_call.1} parent=11 // pred_fallthru
          _
        // Predicated region
        $region41: #{tpu_custom_call.1} parent=11 // pred_check
          %p394 = pneg %p249
        $region42: #{tpu_custom_call.1} parent=11 // pred_check_branch
          %396 = sbr.rel (%p394) target = $region44
        $region43: #{tpu_custom_call.1} parent=11 // pred_region
          _
        $region44: #{tpu_custom_call.1} parent=11 // pred_fallthru
          _
        // Predicated region
        $region45: #{tpu_custom_call.1} parent=11 // pred_check
          %p397 = pneg %p270
        $region46: #{tpu_custom_call.1} parent=11 // pred_check_branch
          %399 = sbr.rel (%p397) target = $region48
        $region47: #{tpu_custom_call.1} parent=11 // pred_region
          _
        $region48: #{tpu_custom_call.1} parent=11 // pred_fallthru
          _
      $region12: #{tpu_custom_call.1} parent=5 // pred_fallthru
        _
      %p400 = scmp.lt.s32.totalorder %s29, 2
      // Predicated region
      $region49: #{tpu_custom_call.1} parent=5 // pred_check
        %p401 = pneg %p400
      $region50: #{tpu_custom_call.1} parent=5 // pred_check_branch
        %403 = sbr.rel (%p401) target = $region52
      $region51: #{tpu_custom_call.1} parent=5 // pred_region
        // Predicated region
        $region53: #{tpu_custom_call.1} parent=51 // pred_check
          %p404 = pneg %p49
        $region54: #{tpu_custom_call.1} parent=51 // pred_check_branch
          %406 = sbr.rel (%p404) target = $region56
        $region55: #{tpu_custom_call.1} parent=51 // pred_region
          %s407 = sand.u32 %s39, 1
          %s408 = scalar_lea.sflag [#allocation3], %s407
          %s409 = sand.u32 %s39, 1
          %s410 = smul.addr %s409, 64
          %s411 = scalar_lea.vmem [#allocation2], %s410
          %s412 = smul.u32 8, %s29
          %414 = vsyncadd %s408, 0
          %s415 = smul.addr %s412, 8
          %s416 = scalar_lea.hbm %s0, %s415
          %s417 = sshll.u32 %s416, 4
          %s418 = int_to_ptr.hbm [resolvable:$true] %s417
          %s419 = sshll.u32 %s411, 4
          %s420 = int_to_ptr.vmem [resolvable:$true] %s419
          %425 = dma.hbm_to_vmem [thread:$0]  %s418, 1024, %s420, %s408, 128, 128, 8
        $region56: #{tpu_custom_call.1} parent=51 // pred_fallthru
          _
        // Predicated region
        $region57: #{tpu_custom_call.1} parent=51 // pred_check
          %p426 = pneg %p75
        $region58: #{tpu_custom_call.1} parent=51 // pred_check_branch
          %428 = sbr.rel (%p426) target = $region60
        $region59: #{tpu_custom_call.1} parent=51 // pred_region
          %s429 = sand.u32 %s29, 1
          %s430 = scalar_lea.sflag [#allocation6], %s429
          %s431 = sand.u32 %s65, 1
          %s432 = smul.addr %s431, 64
          %s433 = scalar_lea.vmem [#allocation5], %s432
          %s434 = smul.u32 8, %s29
          %436 = vsyncadd %s430, 0
          %s437 = smul.addr %s434, 8
          %s438 = scalar_lea.hbm %s1, %s437
          %s439 = sshll.u32 %s438, 4
          %s440 = int_to_ptr.hbm [resolvable:$true] %s439
          %s441 = sshll.u32 %s433, 4
          %s442 = int_to_ptr.vmem [resolvable:$true] %s441
          %447 = dma.hbm_to_vmem [thread:$0]  %s440, 1024, %s442, %s430, 128, 128, 8
        $region60: #{tpu_custom_call.1} parent=51 // pred_fallthru
          _
      $region52: #{tpu_custom_call.1} parent=5 // pred_fallthru
        _
      %p448 = scmp.le.s32.totalorder 1, %s29
      %p449 = scmp.lt.s32.totalorder %s29, 3
      %p450 = pnand %p448, %p449
      %p451 = pneg %p450
      // Predicated region
      $region61: #{tpu_custom_call.1} parent=5 // pred_check
        _
      $region62: #{tpu_custom_call.1} parent=5 // pred_check_branch
        %453 = sbr.rel (%p450) target = $region64
      $region63: #{tpu_custom_call.1} parent=5 // pred_region
        %s454 = ssub.s32 %s29, 1
        %s455 = sand.u32 %s42, 1
        %s456 = scalar_lea.sflag [#allocation3], %s455
        %s457 = sand.u32 %s42, 1
        %s458 = smul.addr %s457, 64
        %s459 = scalar_lea.vmem [#allocation2], %s458
        // Predicated region
        $region65: #{tpu_custom_call.1} parent=63 // pred_check
          %p460 = pneg %p55
        $region66: #{tpu_custom_call.1} parent=63 // pred_check_branch
          %462 = sbr.rel (%p460) target = $region68
        $region67: #{tpu_custom_call.1} parent=63 // pred_region
          %464 = dma.done %s456, 1024
        $region68: #{tpu_custom_call.1} parent=63 // pred_fallthru
          _
        %s465 = sand.u32 %s34, 1
        %s466 = scalar_lea.sflag [#allocation6], %s465
        %s467 = sand.u32 %s68, 1
        %s468 = smul.addr %s467, 64
        %s469 = scalar_lea.vmem [#allocation5], %s468
        // Predicated region
        $region69: #{tpu_custom_call.1} parent=63 // pred_check
          %p470 = pneg %p81
        $region70: #{tpu_custom_call.1} parent=63 // pred_check_branch
          %472 = sbr.rel (%p470) target = $region72
        $region71: #{tpu_custom_call.1} parent=63 // pred_region
          %474 = dma.done %s466, 1024
        $region72: #{tpu_custom_call.1} parent=63 // pred_fallthru
          _
        // Predicated region
        $region73: #{tpu_custom_call.1} parent=63 // pred_check
          %p475 = pneg %p102
        $region74: #{tpu_custom_call.1} parent=63 // pred_check_branch
          %477 = sbr.rel (%p475) target = $region76
        $region75: #{tpu_custom_call.1} parent=63 // pred_region
          %479 = dma.done [#allocation6], 128
        $region76: #{tpu_custom_call.1} parent=63 // pred_fallthru
          _
        // Predicated region
        $region77: #{tpu_custom_call.1} parent=63 // pred_check
          %p480 = pneg %p123
        $region78: #{tpu_custom_call.1} parent=63 // pred_check_branch
          %482 = sbr.rel (%p480) target = $region80
        $region79: #{tpu_custom_call.1} parent=63 // pred_region
          %484 = dma.done [#allocation9], 128
        $region80: #{tpu_custom_call.1} parent=63 // pred_fallthru
          _
        // Predicated region
        $region81: #{tpu_custom_call.1} parent=63 // pred_check
          %p485 = pneg %p144
        $region82: #{tpu_custom_call.1} parent=63 // pred_check_branch
          %487 = sbr.rel (%p485) target = $region84
        $region83: #{tpu_custom_call.1} parent=63 // pred_region
          %489 = dma.done [#allocation9], 256
        $region84: #{tpu_custom_call.1} parent=63 // pred_fallthru
          _
        // Predicated region
        $region85: #{tpu_custom_call.1} parent=63 // pred_check
          %p490 = pneg %p165
        $region86: #{tpu_custom_call.1} parent=63 // pred_check_branch
          %492 = sbr.rel (%p490) target = $region88
        $region87: #{tpu_custom_call.1} parent=63 // pred_region
          %494 = dma.done [#allocation12], 256
        $region88: #{tpu_custom_call.1} parent=63 // pred_fallthru
          _
        // Predicated region
        $region89: #{tpu_custom_call.1} parent=63 // pred_check
          %p495 = pneg %p186
        $region90: #{tpu_custom_call.1} parent=63 // pred_check_branch
          %497 = sbr.rel (%p495) target = $region92
        $region91: #{tpu_custom_call.1} parent=63 // pred_region
          %499 = dma.done [#allocation12], 256
        $region92: #{tpu_custom_call.1} parent=63 // pred_fallthru
          _
        // Predicated region
        $region93: #{tpu_custom_call.1} parent=63 // pred_check
          %p500 = pneg %p207
        $region94: #{tpu_custom_call.1} parent=63 // pred_check_branch
          %502 = sbr.rel (%p500) target = $region96
        $region95: #{tpu_custom_call.1} parent=63 // pred_region
          %504 = dma.done [#allocation15], 256
        $region96: #{tpu_custom_call.1} parent=63 // pred_fallthru
          _
        %s505 = sand.u32 %s42, 1
        %s506 = scalar_lea.sflag [#allocation3], %s505
        %s507 = sand.u32 %s42, 1
        %s508 = smul.addr %s507, 64
        %s509 = scalar_lea.vmem [#allocation2], %s508
        %p510 = pneg %p55
        %p511 = pneg %p52
        %s512 = sand.u32 %s34, 1
        %s513 = scalar_lea.sflag [#allocation6], %s512
        %s514 = sand.u32 %s68, 1
        %s515 = smul.addr %s514, 64
        %s516 = scalar_lea.vmem [#allocation5], %s515
        %p517 = pneg %p81
        %p518 = pneg %p78
        %p519 = pneg %p102
        %p520 = pneg %p99
        %p521 = pneg %p123
        %p522 = pneg %p120
        %p523 = pneg %p144
        %p524 = pneg %p141
        %p525 = pneg %p165
        %p526 = pneg %p162
        %p527 = pneg %p186
        %p528 = pneg %p183
        %p529 = pneg %p207
        %p530 = pneg %p204
        %p531 = pneg %p228
        %p532 = pneg %p225
        %p533 = pneg %p249
        %p534 = pneg %p246
        %p535 = pneg %p270
        %p536 = pneg %p267
        %p537 = pneg %p296
        %p538 = pneg %p293
        %s539 = sand.u32 %s283, 1
        %s540 = scalar_lea.sflag [#allocation4], %s539
        %s541 = sand.u32 %s283, 1
        %s542 = smul.addr %s541, 64
        %s543 = scalar_lea.vmem [#allocation16], %s542
        %s544 = smul.u32 8, %s34
        %s545 = smul.u32 8, %s34
        %s546 = smul.u32 8, %s34
        %v548 = vld [vmem:[%s9] sm:$0x1]
        %v549 = vld [vmem:[%s10] sm:$0x1]
        %v550 = vld [vmem:[%s459] sm:$0xff]
        %v551 = vld [vmem:[%s459 + $0x8] sm:$0xff]
        %v552 = vld [vmem:[%s459 + $0x10] sm:$0xff]
        %v553 = vld [vmem:[%s459 + $0x18] sm:$0xff]
        %v554 = vld [vmem:[%s459 + $0x20] sm:$0xff]
        %v555 = vld [vmem:[%s459 + $0x28] sm:$0xff]
        %v556 = vld [vmem:[%s459 + $0x30] sm:$0xff]
        %v557 = vld [vmem:[%s459 + $0x38] sm:$0xff]
        %v558 = vld [vmem:[#allocation7] sm:$0xff]
        %v559 = vadd.f32 %v550, %v558
        %v560 = vadd.f32 %v551, %v558
        %v561 = vadd.f32 %v552, %v558
        %v562 = vadd.f32 %v553, %v558
        %v563 = vadd.f32 %v554, %v558
        %v564 = vadd.f32 %v555, %v558
        %v565 = vadd.f32 %v556, %v558
        %v566 = vadd.f32 %v557, %v558
        %v567 = vld [vmem:[%s469] sm:$0xff]
        %v568 = vld [vmem:[%s469 + $0x8] sm:$0xff]
        %v569 = vld [vmem:[%s469 + $0x10] sm:$0xff]
        %v570 = vld [vmem:[%s469 + $0x18] sm:$0xff]
        %v571 = vld [vmem:[%s469 + $0x20] sm:$0xff]
        %v572 = vld [vmem:[%s469 + $0x28] sm:$0xff]
        %v573 = vld [vmem:[%s469 + $0x30] sm:$0xff]
        %v574 = vld [vmem:[%s469 + $0x38] sm:$0xff]
        %v575 = vld [vmem:[#allocation8] sm:$0xff]
        %v576 = vadd.f32 %v567, %v575
        %v577 = vadd.f32 %v568, %v575
        %v578 = vadd.f32 %v569, %v575
        %v579 = vadd.f32 %v570, %v575
        %v580 = vadd.f32 %v571, %v575
        %v581 = vadd.f32 %v572, %v575
        %v582 = vadd.f32 %v573, %v575
        %v583 = vadd.f32 %v574, %v575
        %vm584 = vcmask 261120
        %v585 = vsel %vm584, %v559, 0.0
        %586 = vadd.xlane.f32.xlu0 %v585
        %v587 = vpop.xlane.xlu0 %586
        %v588 = vsel %vm584, %v560, 0.0
        %589 = vadd.xlane.f32.xlu0 %v588
        %v590 = vpop.xlane.xlu0 %589
        %v591 = vsel %vm584, %v561, 0.0
        %592 = vadd.xlane.f32.xlu0 %v591
        %v593 = vpop.xlane.xlu0 %592
        %v594 = vsel %vm584, %v562, 0.0
        %595 = vadd.xlane.f32.xlu0 %v594
        %v596 = vpop.xlane.xlu0 %595
        %v597 = vsel %vm584, %v563, 0.0
        %598 = vadd.xlane.f32.xlu0 %v597
        %v599 = vpop.xlane.xlu0 %598
        %v600 = vsel %vm584, %v564, 0.0
        %601 = vadd.xlane.f32.xlu0 %v600
        %v602 = vpop.xlane.xlu0 %601
        %v603 = vsel %vm584, %v565, 0.0
        %604 = vadd.xlane.f32.xlu0 %v603
        %v605 = vpop.xlane.xlu0 %604
        %v606 = vsel %vm584, %v566, 0.0
        %607 = vadd.xlane.f32.xlu0 %v606
        %v608 = vpop.xlane.xlu0 %607
        %v609 = vrcp.pop 32.0
        %v610 = vmul.f32 32.0, %v609
        %v611 = vsub.f32 1.0, %v610
        %v612 = vmul.f32 %v609, %v611
        %v613 = vadd.f32 %v609, %v612
        %vm614 = vweird.f32 %v609
        %v615 = vsel %vm614, %v609, %v613
        %v616 = vmul.f32 %v587, %v615
        %v617 = vmul.f32 %v590, %v615
        %v618 = vmul.f32 %v593, %v615
        %v619 = vmul.f32 %v596, %v615
        %v620 = vmul.f32 %v599, %v615
        %v621 = vmul.f32 %v602, %v615
        %v622 = vmul.f32 %v605, %v615
        %v623 = vmul.f32 %v608, %v615
        %v624 = vsub.f32 %v559, %v616
        %v625 = vsub.f32 %v560, %v617
        %v626 = vsub.f32 %v561, %v618
        %v627 = vsub.f32 %v562, %v619
        %v628 = vsub.f32 %v563, %v620
        %v629 = vsub.f32 %v564, %v621
        %v630 = vsub.f32 %v565, %v622
        %v631 = vsub.f32 %v566, %v623
        %v632 = vmul.f32 %v624, %v624
        %v633 = vmul.f32 %v625, %v625
        %v634 = vmul.f32 %v626, %v626
        %v635 = vmul.f32 %v627, %v627
        %v636 = vmul.f32 %v628, %v628
        %v637 = vmul.f32 %v629, %v629
        %v638 = vmul.f32 %v630, %v630
        %v639 = vmul.f32 %v631, %v631
        %v640 = vsel %vm584, %v632, 0.0
        %641 = vadd.xlane.f32.xlu0 %v640
        %v642 = vpop.xlane.xlu0 %641
        %v643 = vsel %vm584, %v633, 0.0
        %644 = vadd.xlane.f32.xlu0 %v643
        %v645 = vpop.xlane.xlu0 %644
        %v646 = vsel %vm584, %v634, 0.0
        %647 = vadd.xlane.f32.xlu0 %v646
        %v648 = vpop.xlane.xlu0 %647
        %v649 = vsel %vm584, %v635, 0.0
        %650 = vadd.xlane.f32.xlu0 %v649
        %v651 = vpop.xlane.xlu0 %650
        %v652 = vsel %vm584, %v636, 0.0
        %653 = vadd.xlane.f32.xlu0 %v652
        %v654 = vpop.xlane.xlu0 %653
        %v655 = vsel %vm584, %v637, 0.0
        %656 = vadd.xlane.f32.xlu0 %v655
        %v657 = vpop.xlane.xlu0 %656
        %v658 = vsel %vm584, %v638, 0.0
        %659 = vadd.xlane.f32.xlu0 %v658
        %v660 = vpop.xlane.xlu0 %659
        %v661 = vsel %vm584, %v639, 0.0
        %662 = vadd.xlane.f32.xlu0 %v661
        %v663 = vpop.xlane.xlu0 %662
        %v664 = vmul.f32 %v642, %v615
        %v665 = vmul.f32 %v645, %v615
        %v666 = vmul.f32 %v648, %v615
        %v667 = vmul.f32 %v651, %v615
        %v668 = vmul.f32 %v654, %v615
        %v669 = vmul.f32 %v657, %v615
        %v670 = vmul.f32 %v660, %v615
        %v671 = vmul.f32 %v663, %v615
        %v672 = vadd.f32 %v664, 1e-05
        %v673 = vadd.f32 %v665, 1e-05
        %v674 = vadd.f32 %v666, 1e-05
        %v675 = vadd.f32 %v667, 1e-05
        %v676 = vadd.f32 %v668, 1e-05
        %v677 = vadd.f32 %v669, 1e-05
        %v678 = vadd.f32 %v670, 1e-05
        %v679 = vadd.f32 %v671, 1e-05
        %v680 = vrsqrt.pop %v672
        %v681 = vmul.f32 %v680, %v672
        %v682 = vmul.f32 %v681, %v680
        %v683 = vmul.f32 0.5, %v682
        %v684 = vsub.f32 1.5, %v683
        %v685 = vmul.f32 %v680, %v684
        %vm686 = vweird.f32 %v672
        %vm687 = vweird.f32 %v680
        %vm688 = vmor %vm686, %vm687
        %v689 = vsel %vm688, %v680, %v685
        %v690 = vrsqrt.pop %v673
        %v691 = vmul.f32 %v690, %v673
        %v692 = vmul.f32 %v691, %v690
        %v693 = vmul.f32 0.5, %v692
        %v694 = vsub.f32 1.5, %v693
        %v695 = vmul.f32 %v690, %v694
        %vm696 = vweird.f32 %v673
        %vm697 = vweird.f32 %v690
        %vm698 = vmor %vm696, %vm697
        %v699 = vsel %vm698, %v690, %v695
        %v700 = vrsqrt.pop %v674
        %v701 = vmul.f32 %v700, %v674
        %v702 = vmul.f32 %v701, %v700
        %v703 = vmul.f32 0.5, %v702
        %v704 = vsub.f32 1.5, %v703
        %v705 = vmul.f32 %v700, %v704
        %vm706 = vweird.f32 %v674
        %vm707 = vweird.f32 %v700
        %vm708 = vmor %vm706, %vm707
        %v709 = vsel %vm708, %v700, %v705
        %v710 = vrsqrt.pop %v675
        %v711 = vmul.f32 %v710, %v675
        %v712 = vmul.f32 %v711, %v710
        %v713 = vmul.f32 0.5, %v712
        %v714 = vsub.f32 1.5, %v713
        %v715 = vmul.f32 %v710, %v714
        %vm716 = vweird.f32 %v675
        %vm717 = vweird.f32 %v710
        %vm718 = vmor %vm716, %vm717
        %v719 = vsel %vm718, %v710, %v715
        %v720 = vrsqrt.pop %v676
        %v721 = vmul.f32 %v720, %v676
        %v722 = vmul.f32 %v721, %v720
        %v723 = vmul.f32 0.5, %v722
        %v724 = vsub.f32 1.5, %v723
        %v725 = vmul.f32 %v720, %v724
        %vm726 = vweird.f32 %v676
        %vm727 = vweird.f32 %v720
        %vm728 = vmor %vm726, %vm727
        %v729 = vsel %vm728, %v720, %v725
        %v730 = vrsqrt.pop %v677
        %v731 = vmul.f32 %v730, %v677
        %v732 = vmul.f32 %v731, %v730
        %v733 = vmul.f32 0.5, %v732
        %v734 = vsub.f32 1.5, %v733
        %v735 = vmul.f32 %v730, %v734
        %vm736 = vweird.f32 %v677
        %vm737 = vweird.f32 %v730
        %vm738 = vmor %vm736, %vm737
        %v739 = vsel %vm738, %v730, %v735
        %v740 = vrsqrt.pop %v678
        %v741 = vmul.f32 %v740, %v678
        %v742 = vmul.f32 %v741, %v740
        %v743 = vmul.f32 0.5, %v742
        %v744 = vsub.f32 1.5, %v743
        %v745 = vmul.f32 %v740, %v744
        %vm746 = vweird.f32 %v678
        %vm747 = vweird.f32 %v740
        %vm748 = vmor %vm746, %vm747
        %v749 = vsel %vm748, %v740, %v745
        %v750 = vrsqrt.pop %v679
        %v751 = vmul.f32 %v750, %v679
        %v752 = vmul.f32 %v751, %v750
        %v753 = vmul.f32 0.5, %v752
        %v754 = vsub.f32 1.5, %v753
        %v755 = vmul.f32 %v750, %v754
        %vm756 = vweird.f32 %v679
        %vm757 = vweird.f32 %v750
        %vm758 = vmor %vm756, %vm757
        %v759 = vsel %vm758, %v750, %v755
        %v760 = vmul.f32 %v624, %v689
        %v761 = vmul.f32 %v625, %v699
        %v762 = vmul.f32 %v626, %v709
        %v763 = vmul.f32 %v627, %v719
        %v764 = vmul.f32 %v628, %v729
        %v765 = vmul.f32 %v629, %v739
        %v766 = vmul.f32 %v630, %v749
        %v767 = vmul.f32 %v631, %v759
        %v769 = vperm.slane %v548, 0
        %v771 = vmul.f32 %v760, %v769
        %v772 = vmul.f32 %v761, %v769
        %v773 = vmul.f32 %v762, %v769
        %v774 = vmul.f32 %v763, %v769
        %v775 = vmul.f32 %v764, %v769
        %v776 = vmul.f32 %v765, %v769
        %v777 = vmul.f32 %v766, %v769
        %v778 = vmul.f32 %v767, %v769
        %v780 = vperm.slane %v549, 0
        %v782 = vadd.f32 %v771, %v780
        %v783 = vadd.f32 %v772, %v780
        %v784 = vadd.f32 %v773, %v780
        %v785 = vadd.f32 %v774, %v780
        %v786 = vadd.f32 %v775, %v780
        %v787 = vadd.f32 %v776, %v780
        %v788 = vadd.f32 %v777, %v780
        %v789 = vadd.f32 %v778, %v780
        %v790 = vsel %vm584, %v576, 0.0
        %791 = vadd.xlane.f32.xlu0 %v790
        %v792 = vpop.xlane.xlu0 %791
        %v793 = vsel %vm584, %v577, 0.0
        %794 = vadd.xlane.f32.xlu0 %v793
        %v795 = vpop.xlane.xlu0 %794
        %v796 = vsel %vm584, %v578, 0.0
        %797 = vadd.xlane.f32.xlu0 %v796
        %v798 = vpop.xlane.xlu0 %797
        %v799 = vsel %vm584, %v579, 0.0
        %800 = vadd.xlane.f32.xlu0 %v799
        %v801 = vpop.xlane.xlu0 %800
        %v802 = vsel %vm584, %v580, 0.0
        %803 = vadd.xlane.f32.xlu0 %v802
        %v804 = vpop.xlane.xlu0 %803
        %v805 = vsel %vm584, %v581, 0.0
        %806 = vadd.xlane.f32.xlu0 %v805
        %v807 = vpop.xlane.xlu0 %806
        %v808 = vsel %vm584, %v582, 0.0
        %809 = vadd.xlane.f32.xlu0 %v808
        %v810 = vpop.xlane.xlu0 %809
        %v811 = vsel %vm584, %v583, 0.0
        %812 = vadd.xlane.f32.xlu0 %v811
        %v813 = vpop.xlane.xlu0 %812
        %v814 = vmul.f32 %v792, %v615
        %v815 = vmul.f32 %v795, %v615
        %v816 = vmul.f32 %v798, %v615
        %v817 = vmul.f32 %v801, %v615
        %v818 = vmul.f32 %v804, %v615
        %v819 = vmul.f32 %v807, %v615
        %v820 = vmul.f32 %v810, %v615
        %v821 = vmul.f32 %v813, %v615
        %v822 = vsub.f32 %v576, %v814
        %v823 = vsub.f32 %v577, %v815
        %v824 = vsub.f32 %v578, %v816
        %v825 = vsub.f32 %v579, %v817
        %v826 = vsub.f32 %v580, %v818
        %v827 = vsub.f32 %v581, %v819
        %v828 = vsub.f32 %v582, %v820
        %v829 = vsub.f32 %v583, %v821
        %v830 = vmul.f32 %v822, %v822
        %v831 = vmul.f32 %v823, %v823
        %v832 = vmul.f32 %v824, %v824
        %v833 = vmul.f32 %v825, %v825
        %v834 = vmul.f32 %v826, %v826
        %v835 = vmul.f32 %v827, %v827
        %v836 = vmul.f32 %v828, %v828
        %v837 = vmul.f32 %v829, %v829
        %v838 = vsel %vm584, %v830, 0.0
        %839 = vadd.xlane.f32.xlu0 %v838
        %v840 = vpop.xlane.xlu0 %839
        %v841 = vsel %vm584, %v831, 0.0
        %842 = vadd.xlane.f32.xlu0 %v841
        %v843 = vpop.xlane.xlu0 %842
        %v844 = vsel %vm584, %v832, 0.0
        %845 = vadd.xlane.f32.xlu0 %v844
        %v846 = vpop.xlane.xlu0 %845
        %v847 = vsel %vm584, %v833, 0.0
        %848 = vadd.xlane.f32.xlu0 %v847
        %v849 = vpop.xlane.xlu0 %848
        %v850 = vsel %vm584, %v834, 0.0
        %851 = vadd.xlane.f32.xlu0 %v850
        %v852 = vpop.xlane.xlu0 %851
        %v853 = vsel %vm584, %v835, 0.0
        %854 = vadd.xlane.f32.xlu0 %v853
        %v855 = vpop.xlane.xlu0 %854
        %v856 = vsel %vm584, %v836, 0.0
        %857 = vadd.xlane.f32.xlu0 %v856
        %v858 = vpop.xlane.xlu0 %857
        %v859 = vsel %vm584, %v837, 0.0
        %860 = vadd.xlane.f32.xlu0 %v859
        %v861 = vpop.xlane.xlu0 %860
        %v862 = vmul.f32 %v840, %v615
        %v863 = vmul.f32 %v843, %v615
        %v864 = vmul.f32 %v846, %v615
        %v865 = vmul.f32 %v849, %v615
        %v866 = vmul.f32 %v852, %v615
        %v867 = vmul.f32 %v855, %v615
        %v868 = vmul.f32 %v858, %v615
        %v869 = vmul.f32 %v861, %v615
        %v870 = vadd.f32 %v862, 1e-05
        %v871 = vadd.f32 %v863, 1e-05
        %v872 = vadd.f32 %v864, 1e-05
        %v873 = vadd.f32 %v865, 1e-05
        %v874 = vadd.f32 %v866, 1e-05
        %v875 = vadd.f32 %v867, 1e-05
        %v876 = vadd.f32 %v868, 1e-05
        %v877 = vadd.f32 %v869, 1e-05
        %v878 = vrsqrt.pop %v870
        %v879 = vmul.f32 %v878, %v870
        %v880 = vmul.f32 %v879, %v878
        %v881 = vmul.f32 0.5, %v880
        %v882 = vsub.f32 1.5, %v881
        %v883 = vmul.f32 %v878, %v882
        %vm884 = vweird.f32 %v870
        %vm885 = vweird.f32 %v878
        %vm886 = vmor %vm884, %vm885
        %v887 = vsel %vm886, %v878, %v883
        %v888 = vrsqrt.pop %v871
        %v889 = vmul.f32 %v888, %v871
        %v890 = vmul.f32 %v889, %v888
        %v891 = vmul.f32 0.5, %v890
        %v892 = vsub.f32 1.5, %v891
        %v893 = vmul.f32 %v888, %v892
        %vm894 = vweird.f32 %v871
        %vm895 = vweird.f32 %v888
        %vm896 = vmor %vm894, %vm895
        %v897 = vsel %vm896, %v888, %v893
        %v898 = vrsqrt.pop %v872
        %v899 = vmul.f32 %v898, %v872
        %v900 = vmul.f32 %v899, %v898
        %v901 = vmul.f32 0.5, %v900
        %v902 = vsub.f32 1.5, %v901
        %v903 = vmul.f32 %v898, %v902
        %vm904 = vweird.f32 %v872
        %vm905 = vweird.f32 %v898
        %vm906 = vmor %vm904, %vm905
        %v907 = vsel %vm906, %v898, %v903
        %v908 = vrsqrt.pop %v873
        %v909 = vmul.f32 %v908, %v873
        %v910 = vmul.f32 %v909, %v908
        %v911 = vmul.f32 0.5, %v910
        %v912 = vsub.f32 1.5, %v911
        %v913 = vmul.f32 %v908, %v912
        %vm914 = vweird.f32 %v873
        %vm915 = vweird.f32 %v908
        %vm916 = vmor %vm914, %vm915
        %v917 = vsel %vm916, %v908, %v913
        %v918 = vrsqrt.pop %v874
        %v919 = vmul.f32 %v918, %v874
        %v920 = vmul.f32 %v919, %v918
        %v921 = vmul.f32 0.5, %v920
        %v922 = vsub.f32 1.5, %v921
        %v923 = vmul.f32 %v918, %v922
        %vm924 = vweird.f32 %v874
        %vm925 = vweird.f32 %v918
        %vm926 = vmor %vm924, %vm925
        %v927 = vsel %vm926, %v918, %v923
        %v928 = vrsqrt.pop %v875
        %v929 = vmul.f32 %v928, %v875
        %v930 = vmul.f32 %v929, %v928
        %v931 = vmul.f32 0.5, %v930
        %v932 = vsub.f32 1.5, %v931
        %v933 = vmul.f32 %v928, %v932
        %vm934 = vweird.f32 %v875
        %vm935 = vweird.f32 %v928
        %vm936 = vmor %vm934, %vm935
        %v937 = vsel %vm936, %v928, %v933
        %v938 = vrsqrt.pop %v876
        %v939 = vmul.f32 %v938, %v876
        %v940 = vmul.f32 %v939, %v938
        %v941 = vmul.f32 0.5, %v940
        %v942 = vsub.f32 1.5, %v941
        %v943 = vmul.f32 %v938, %v942
        %vm944 = vweird.f32 %v876
        %vm945 = vweird.f32 %v938
        %vm946 = vmor %vm944, %vm945
        %v947 = vsel %vm946, %v938, %v943
        %v948 = vrsqrt.pop %v877
        %v949 = vmul.f32 %v948, %v877
        %v950 = vmul.f32 %v949, %v948
        %v951 = vmul.f32 0.5, %v950
        %v952 = vsub.f32 1.5, %v951
        %v953 = vmul.f32 %v948, %v952
        %vm954 = vweird.f32 %v877
        %vm955 = vweird.f32 %v948
        %vm956 = vmor %vm954, %vm955
        %v957 = vsel %vm956, %v948, %v953
        %v958 = vmul.f32 %v822, %v887
        %v959 = vmul.f32 %v823, %v897
        %v960 = vmul.f32 %v824, %v907
        %v961 = vmul.f32 %v825, %v917
        %v962 = vmul.f32 %v826, %v927
        %v963 = vmul.f32 %v827, %v937
        %v964 = vmul.f32 %v828, %v947
        %v965 = vmul.f32 %v829, %v957
        %v966 = vmul.f32 %v958, %v769
        %v967 = vmul.f32 %v959, %v769
        %v968 = vmul.f32 %v960, %v769
        %v969 = vmul.f32 %v961, %v769
        %v970 = vmul.f32 %v962, %v769
        %v971 = vmul.f32 %v963, %v769
        %v972 = vmul.f32 %v964, %v769
        %v973 = vmul.f32 %v965, %v769
        %v974 = vadd.f32 %v966, %v780
        %v975 = vadd.f32 %v967, %v780
        %v976 = vadd.f32 %v968, %v780
        %v977 = vadd.f32 %v969, %v780
        %v978 = vadd.f32 %v970, %v780
        %v979 = vadd.f32 %v971, %v780
        %v980 = vadd.f32 %v972, %v780
        %v981 = vadd.f32 %v973, %v780
        %v982 = vpack.c.bf16 %v783, %v782
        %v983 = vpack.c.bf16 %v785, %v784
        %v984 = vpack.c.bf16 %v787, %v786
        %v985 = vpack.c.bf16 %v789, %v788
        %v986 = vpack.c.bf16 %v974, %v782
        %v987 = vpack.c.bf16 %v975, %v783
        %v988 = vpack.c.bf16 %v976, %v784
        %v989 = vpack.c.bf16 %v977, %v785
        %v990 = vpack.c.bf16 %v978, %v786
        %v991 = vpack.c.bf16 %v979, %v787
        %v992 = vpack.c.bf16 %v980, %v788
        %v993 = vpack.c.bf16 %v981, %v789
        %v994 = vld [vmem:[#allocation10] sm:$0xf]
        %v995 = vld [vmem:[#allocation10 + $0x4] sm:$0xf]
        %v996 = vld [vmem:[#allocation10 + $0x8] sm:$0xf]
        %v997 = vld [vmem:[#allocation10 + $0xc] sm:$0xf]
        %v1002 = vunpack.c.l.b16 %v994
        %v1003 = vunpack.c.l.b16 %v995
        %v1004 = vunpack.c.l.b16 %v996
        %v1005 = vunpack.c.l.b16 %v997
        %v1006 = vpack.c.b16 %v1003, %v1002
        %v1007 = vpack.c.b16 %v1005, %v1004
        %v1011 = vsel %vm584, %v982, 0
        %v1014 = vsel %vm584, %v983, 0
        %v1017 = vsel %vm584, %v984, 0
        %v1020 = vsel %vm584, %v985, 0
        %1022 = vmatpush.bf16.msra.mxu0 0
        %1023 = vmatpush.bf16.msra.mxu0 0
        %1024 = vmatpush.bf16.msra.mxu0 0
        %1025 = vmatpush.bf16.msra.mxu0 0
        %1026 = vmatpush.bf16.msra.mxu0 0
        %1027 = vmatpush.bf16.msra.mxu0 0
        %1028 = vmatpush.bf16.msra.mxu0 %v1007
        %1029 = vmatpush.bf16.msra.mxu0 %v1006
        %1030 = vmatmul.bf16.gmra.mxu0 %v1011
        %v1031 = vpop.f32.mrf.mxu0
        %v1032 = vadd.f32 0.0, %v1031
        %v1033 = vpop.f32.mrf.mxu0
        %v1034 = vadd.f32 0.0, %v1033
        %1035 = vmatmul.bf16.gmra.mxu0 %v1014
        %v1036 = vpop.f32.mrf.mxu0
        %v1037 = vadd.f32 0.0, %v1036
        %v1038 = vpop.f32.mrf.mxu0
        %v1039 = vadd.f32 0.0, %v1038
        %1040 = vmatmul.bf16.gmra.mxu0 %v1017
        %v1041 = vpop.f32.mrf.mxu0
        %v1042 = vadd.f32 0.0, %v1041
        %v1043 = vpop.f32.mrf.mxu0
        %v1044 = vadd.f32 0.0, %v1043
        %1045 = vmatmul.bf16.gmra.mxu0 %v1020
        %v1046 = vpop.f32.mrf.mxu0
        %v1047 = vadd.f32 0.0, %v1046
        %v1048 = vpop.f32.mrf.mxu0
        %v1049 = vadd.f32 0.0, %v1048
        %1050 = vdwg.mxu0
        %v1051 = vld [vmem:[#allocation11] sm:$0xf]
        %v1052 = vld [vmem:[#allocation11 + $0x4] sm:$0xf]
        %v1053 = vld [vmem:[#allocation11 + $0x8] sm:$0xf]
        %v1054 = vld [vmem:[#allocation11 + $0xc] sm:$0xf]
        %v1059 = vunpack.c.l.b16 %v1051
        %v1060 = vunpack.c.l.b16 %v1052
        %v1061 = vunpack.c.l.b16 %v1053
        %v1062 = vunpack.c.l.b16 %v1054
        %v1063 = vpack.c.b16 %v1060, %v1059
        %v1064 = vpack.c.b16 %v1062, %v1061
        %v1068 = vsel %vm584, %v986, 0
        %v1071 = vsel %vm584, %v987, 0
        %v1074 = vsel %vm584, %v988, 0
        %v1077 = vsel %vm584, %v989, 0
        %v1080 = vsel %vm584, %v990, 0
        %v1083 = vsel %vm584, %v991, 0
        %v1086 = vsel %vm584, %v992, 0
        %v1089 = vsel %vm584, %v993, 0
        %1091 = vmatpush.bf16.msra.mxu0 0
        %1092 = vmatpush.bf16.msra.mxu0 0
        %1093 = vmatpush.bf16.msra.mxu0 0
        %1094 = vmatpush.bf16.msra.mxu0 0
        %1095 = vmatpush.bf16.msra.mxu0 0
        %1096 = vmatpush.bf16.msra.mxu0 0
        %1097 = vmatpush.bf16.msra.mxu0 %v1064
        %1098 = vmatpush.bf16.msra.mxu0 %v1063
        %1099 = vmatmul.bf16.gmra.mxu0 %v1068
        %v1100 = vpop.f32.mrf.mxu0
        %v1101 = vadd.f32 0.0, %v1100
        %v1102 = vpop.f32.mrf.mxu0
        %v1103 = vadd.f32 0.0, %v1102
        %1104 = vmatmul.bf16.gmra.mxu0 %v1071
        %v1105 = vpop.f32.mrf.mxu0
        %v1106 = vadd.f32 0.0, %v1105
        %v1107 = vpop.f32.mrf.mxu0
        %v1108 = vadd.f32 0.0, %v1107
        %1109 = vmatmul.bf16.gmra.mxu0 %v1074
        %v1110 = vpop.f32.mrf.mxu0
        %v1111 = vadd.f32 0.0, %v1110
        %v1112 = vpop.f32.mrf.mxu0
        %v1113 = vadd.f32 0.0, %v1112
        %1114 = vmatmul.bf16.gmra.mxu0 %v1077
        %v1115 = vpop.f32.mrf.mxu0
        %v1116 = vadd.f32 0.0, %v1115
        %v1117 = vpop.f32.mrf.mxu0
        %v1118 = vadd.f32 0.0, %v1117
        %1119 = vmatmul.bf16.gmra.mxu0 %v1080
        %v1120 = vpop.f32.mrf.mxu0
        %v1121 = vadd.f32 0.0, %v1120
        %v1122 = vpop.f32.mrf.mxu0
        %v1123 = vadd.f32 0.0, %v1122
        %1124 = vmatmul.bf16.gmra.mxu0 %v1083
        %v1125 = vpop.f32.mrf.mxu0
        %v1126 = vadd.f32 0.0, %v1125
        %v1127 = vpop.f32.mrf.mxu0
        %v1128 = vadd.f32 0.0, %v1127
        %1129 = vmatmul.bf16.gmra.mxu0 %v1086
        %v1130 = vpop.f32.mrf.mxu0
        %v1131 = vadd.f32 0.0, %v1130
        %v1132 = vpop.f32.mrf.mxu0
        %v1133 = vadd.f32 0.0, %v1132
        %1134 = vmatmul.bf16.gmra.mxu0 %v1089
        %v1135 = vpop.f32.mrf.mxu0
        %v1136 = vadd.f32 0.0, %v1135
        %v1137 = vpop.f32.mrf.mxu0
        %v1138 = vadd.f32 0.0, %v1137
        %1139 = vdwg.mxu0
        %v1140 = vld [vmem:[#allocation13] sm:$0xf]
        %v1141 = vld [vmem:[#allocation13 + $0x4] sm:$0xf]
        %v1142 = vld [vmem:[#allocation13 + $0x8] sm:$0xf]
        %v1143 = vld [vmem:[#allocation13 + $0xc] sm:$0xf]
        %v1148 = vunpack.c.l.b16 %v1140
        %v1149 = vunpack.c.l.b16 %v1141
        %v1150 = vunpack.c.l.b16 %v1142
        %v1151 = vunpack.c.l.b16 %v1143
        %v1152 = vpack.c.b16 %v1149, %v1148
        %v1153 = vpack.c.b16 %v1151, %v1150
        %1156 = vmatpush.bf16.msra.mxu0 0
        %1157 = vmatpush.bf16.msra.mxu0 0
        %1158 = vmatpush.bf16.msra.mxu0 0
        %1159 = vmatpush.bf16.msra.mxu0 0
        %1160 = vmatpush.bf16.msra.mxu0 0
        %1161 = vmatpush.bf16.msra.mxu0 0
        %1162 = vmatpush.bf16.msra.mxu0 %v1153
        %1163 = vmatpush.bf16.msra.mxu0 %v1152
        %1164 = vmatmul.bf16.gmra.mxu0 %v1068
        %v1165 = vpop.f32.mrf.mxu0
        %v1166 = vadd.f32 0.0, %v1165
        %v1167 = vpop.f32.mrf.mxu0
        %v1168 = vadd.f32 0.0, %v1167
        %1169 = vmatmul.bf16.gmra.mxu0 %v1071
        %v1170 = vpop.f32.mrf.mxu0
        %v1171 = vadd.f32 0.0, %v1170
        %v1172 = vpop.f32.mrf.mxu0
        %v1173 = vadd.f32 0.0, %v1172
        %1174 = vmatmul.bf16.gmra.mxu0 %v1074
        %v1175 = vpop.f32.mrf.mxu0
        %v1176 = vadd.f32 0.0, %v1175
        %v1177 = vpop.f32.mrf.mxu0
        %v1178 = vadd.f32 0.0, %v1177
        %1179 = vmatmul.bf16.gmra.mxu0 %v1077
        %v1180 = vpop.f32.mrf.mxu0
        %v1181 = vadd.f32 0.0, %v1180
        %v1182 = vpop.f32.mrf.mxu0
        %v1183 = vadd.f32 0.0, %v1182
        %1184 = vmatmul.bf16.gmra.mxu0 %v1080
        %v1185 = vpop.f32.mrf.mxu0
        %v1186 = vadd.f32 0.0, %v1185
        %v1187 = vpop.f32.mrf.mxu0
        %v1188 = vadd.f32 0.0, %v1187
        %1189 = vmatmul.bf16.gmra.mxu0 %v1083
        %v1190 = vpop.f32.mrf.mxu0
        %v1191 = vadd.f32 0.0, %v1190
        %v1192 = vpop.f32.mrf.mxu0
        %v1193 = vadd.f32 0.0, %v1192
        %1194 = vmatmul.bf16.gmra.mxu0 %v1086
        %v1195 = vpop.f32.mrf.mxu0
        %v1196 = vadd.f32 0.0, %v1195
        %v1197 = vpop.f32.mrf.mxu0
        %v1198 = vadd.f32 0.0, %v1197
        %1199 = vmatmul.bf16.gmra.mxu0 %v1089
        %v1200 = vpop.f32.mrf.mxu0
        %v1201 = vadd.f32 0.0, %v1200
        %v1202 = vpop.f32.mrf.mxu0
        %v1203 = vadd.f32 0.0, %v1202
        %1204 = vdwg.mxu0
        %v1205 = vpack.c.bf16 %v1032, %v1032
        %v1206 = vpack.c.bf16 %v1034, %v1034
        %v1207 = vpack.c.bf16 %v1037, %v1037
        %v1208 = vpack.c.bf16 %v1039, %v1039
        %v1209 = vpack.c.bf16 %v1042, %v1042
        %v1210 = vpack.c.bf16 %v1044, %v1044
        %v1211 = vpack.c.bf16 %v1047, %v1047
        %v1212 = vpack.c.bf16 %v1049, %v1049
        %v1213 = vpack.c.bf16 %v1101, %v1101
        %v1214 = vpack.c.bf16 %v1103, %v1103
        %v1215 = vpack.c.bf16 %v1106, %v1106
        %v1216 = vpack.c.bf16 %v1108, %v1108
        %v1217 = vpack.c.bf16 %v1111, %v1111
        %v1218 = vpack.c.bf16 %v1113, %v1113
        %v1219 = vpack.c.bf16 %v1116, %v1116
        %v1220 = vpack.c.bf16 %v1118, %v1118
        %v1221 = vpack.c.bf16 %v1121, %v1121
        %v1222 = vpack.c.bf16 %v1123, %v1123
        %v1223 = vpack.c.bf16 %v1126, %v1126
        %v1224 = vpack.c.bf16 %v1128, %v1128
        %v1225 = vpack.c.bf16 %v1131, %v1131
        %v1226 = vpack.c.bf16 %v1133, %v1133
        %v1227 = vpack.c.bf16 %v1136, %v1136
        %v1228 = vpack.c.bf16 %v1138, %v1138
        %v1229 = vpack.c.bf16 %v1166, %v1166
        %v1230 = vpack.c.bf16 %v1168, %v1168
        %v1231 = vpack.c.bf16 %v1171, %v1171
        %v1232 = vpack.c.bf16 %v1173, %v1173
        %v1233 = vpack.c.bf16 %v1176, %v1176
        %v1234 = vpack.c.bf16 %v1178, %v1178
        %v1235 = vpack.c.bf16 %v1181, %v1181
        %v1236 = vpack.c.bf16 %v1183, %v1183
        %v1237 = vpack.c.bf16 %v1186, %v1186
        %v1238 = vpack.c.bf16 %v1188, %v1188
        %v1239 = vpack.c.bf16 %v1191, %v1191
        %v1240 = vpack.c.bf16 %v1193, %v1193
        %v1241 = vpack.c.bf16 %v1196, %v1196
        %v1242 = vpack.c.bf16 %v1198, %v1198
        %v1243 = vpack.c.bf16 %v1201, %v1201
        %v1244 = vpack.c.bf16 %v1203, %v1203
        %v1247 = vunpack.c.l.b16 %v1213
        %v1248 = vunpack.c.l.b16 %v1214
        %v1249 = vpack.c.b16 %v1248, %v1247
        %vm1250 = vcmask 130048
        %v1252 = vsel %vm1250, %v1205, 0
        %v1255 = vsel %vm1250, %v1249, 0
        %1257 = vmatpush.bf16.xpose.msra.mxu0 0
        %1258 = vmatpush.bf16.xpose.msra.mxu0 0
        %1259 = vmatpush.bf16.xpose.msra.mxu0 0
        %1260 = vmatpush.bf16.xpose.msra.mxu0 0
        %1261 = vmatpush.bf16.xpose.msra.mxu0 0
        %1262 = vmatpush.bf16.xpose.msra.mxu0 0
        %1263 = vmatpush.bf16.xpose.msra.mxu0 0
        %1264 = vmatpush.bf16.xpose.msra.mxu0 %v1255
        %1265 = vmatmul.bf16.gmra.mxu0 %v1252
        %v1266 = vpop.f32.mrf.mxu0
        %v1267 = vadd.f32 0.0, %v1266
        %v1268 = vpop.f32.mrf.mxu0
        %1269 = vdwg.mxu0
        %v1272 = vunpack.c.l.b16 %v1215
        %v1273 = vunpack.c.l.b16 %v1216
        %v1274 = vpack.c.b16 %v1273, %v1272
        %v1276 = vsel %vm1250, %v1206, 0
        %v1279 = vsel %vm1250, %v1274, 0
        %1281 = vmatpush.bf16.xpose.msra.mxu0 0
        %1282 = vmatpush.bf16.xpose.msra.mxu0 0
        %1283 = vmatpush.bf16.xpose.msra.mxu0 0
        %1284 = vmatpush.bf16.xpose.msra.mxu0 0
        %1285 = vmatpush.bf16.xpose.msra.mxu0 0
        %1286 = vmatpush.bf16.xpose.msra.mxu0 0
        %1287 = vmatpush.bf16.xpose.msra.mxu0 0
        %1288 = vmatpush.bf16.xpose.msra.mxu0 %v1279
        %1289 = vmatmul.bf16.gmra.mxu0 %v1276
        %v1290 = vpop.f32.mrf.mxu0
        %v1291 = vadd.f32 0.0, %v1290
        %v1292 = vpop.f32.mrf.mxu0
        %1293 = vdwg.mxu0
        %v1296 = vunpack.c.l.b16 %v1217
        %v1297 = vunpack.c.l.b16 %v1218
        %v1298 = vpack.c.b16 %v1297, %v1296
        %v1300 = vsel %vm1250, %v1207, 0
        %v1303 = vsel %vm1250, %v1298, 0
        %1305 = vmatpush.bf16.xpose.msra.mxu0 0
        %1306 = vmatpush.bf16.xpose.msra.mxu0 0
        %1307 = vmatpush.bf16.xpose.msra.mxu0 0
        %1308 = vmatpush.bf16.xpose.msra.mxu0 0
        %1309 = vmatpush.bf16.xpose.msra.mxu0 0
        %1310 = vmatpush.bf16.xpose.msra.mxu0 0
        %1311 = vmatpush.bf16.xpose.msra.mxu0 0
        %1312 = vmatpush.bf16.xpose.msra.mxu0 %v1303
        %1313 = vmatmul.bf16.gmra.mxu0 %v1300
        %v1314 = vpop.f32.mrf.mxu0
        %v1315 = vadd.f32 0.0, %v1314
        %v1316 = vpop.f32.mrf.mxu0
        %1317 = vdwg.mxu0
        %v1320 = vunpack.c.l.b16 %v1219
        %v1321 = vunpack.c.l.b16 %v1220
        %v1322 = vpack.c.b16 %v1321, %v1320
        %v1324 = vsel %vm1250, %v1208, 0
        %v1327 = vsel %vm1250, %v1322, 0
        %1329 = vmatpush.bf16.xpose.msra.mxu0 0
        %1330 = vmatpush.bf16.xpose.msra.mxu0 0
        %1331 = vmatpush.bf16.xpose.msra.mxu0 0
        %1332 = vmatpush.bf16.xpose.msra.mxu0 0
        %1333 = vmatpush.bf16.xpose.msra.mxu0 0
        %1334 = vmatpush.bf16.xpose.msra.mxu0 0
        %1335 = vmatpush.bf16.xpose.msra.mxu0 0
        %1336 = vmatpush.bf16.xpose.msra.mxu0 %v1327
        %1337 = vmatmul.bf16.gmra.mxu0 %v1324
        %v1338 = vpop.f32.mrf.mxu0
        %v1339 = vadd.f32 0.0, %v1338
        %v1340 = vpop.f32.mrf.mxu0
        %1341 = vdwg.mxu0
        %v1344 = vunpack.c.l.b16 %v1221
        %v1345 = vunpack.c.l.b16 %v1222
        %v1346 = vpack.c.b16 %v1345, %v1344
        %v1348 = vsel %vm1250, %v1209, 0
        %v1351 = vsel %vm1250, %v1346, 0
        %1353 = vmatpush.bf16.xpose.msra.mxu0 0
        %1354 = vmatpush.bf16.xpose.msra.mxu0 0
        %1355 = vmatpush.bf16.xpose.msra.mxu0 0
        %1356 = vmatpush.bf16.xpose.msra.mxu0 0
        %1357 = vmatpush.bf16.xpose.msra.mxu0 0
        %1358 = vmatpush.bf16.xpose.msra.mxu0 0
        %1359 = vmatpush.bf16.xpose.msra.mxu0 0
        %1360 = vmatpush.bf16.xpose.msra.mxu0 %v1351
        %1361 = vmatmul.bf16.gmra.mxu0 %v1348
        %v1362 = vpop.f32.mrf.mxu0
        %v1363 = vadd.f32 0.0, %v1362
        %v1364 = vpop.f32.mrf.mxu0
        %1365 = vdwg.mxu0
        %v1368 = vunpack.c.l.b16 %v1223
        %v1369 = vunpack.c.l.b16 %v1224
        %v1370 = vpack.c.b16 %v1369, %v1368
        %v1372 = vsel %vm1250, %v1210, 0
        %v1375 = vsel %vm1250, %v1370, 0
        %1377 = vmatpush.bf16.xpose.msra.mxu0 0
        %1378 = vmatpush.bf16.xpose.msra.mxu0 0
        %1379 = vmatpush.bf16.xpose.msra.mxu0 0
        %1380 = vmatpush.bf16.xpose.msra.mxu0 0
        %1381 = vmatpush.bf16.xpose.msra.mxu0 0
        %1382 = vmatpush.bf16.xpose.msra.mxu0 0
        %1383 = vmatpush.bf16.xpose.msra.mxu0 0
        %1384 = vmatpush.bf16.xpose.msra.mxu0 %v1375
        %1385 = vmatmul.bf16.gmra.mxu0 %v1372
        %v1386 = vpop.f32.mrf.mxu0
        %v1387 = vadd.f32 0.0, %v1386
        %v1388 = vpop.f32.mrf.mxu0
        %1389 = vdwg.mxu0
        %v1392 = vunpack.c.l.b16 %v1225
        %v1393 = vunpack.c.l.b16 %v1226
        %v1394 = vpack.c.b16 %v1393, %v1392
        %v1396 = vsel %vm1250, %v1211, 0
        %v1399 = vsel %vm1250, %v1394, 0
        %1401 = vmatpush.bf16.xpose.msra.mxu0 0
        %1402 = vmatpush.bf16.xpose.msra.mxu0 0
        %1403 = vmatpush.bf16.xpose.msra.mxu0 0
        %1404 = vmatpush.bf16.xpose.msra.mxu0 0
        %1405 = vmatpush.bf16.xpose.msra.mxu0 0
        %1406 = vmatpush.bf16.xpose.msra.mxu0 0
        %1407 = vmatpush.bf16.xpose.msra.mxu0 0
        %1408 = vmatpush.bf16.xpose.msra.mxu0 %v1399
        %1409 = vmatmul.bf16.gmra.mxu0 %v1396
        %v1410 = vpop.f32.mrf.mxu0
        %v1411 = vadd.f32 0.0, %v1410
        %v1412 = vpop.f32.mrf.mxu0
        %1413 = vdwg.mxu0
        %v1416 = vunpack.c.l.b16 %v1227
        %v1417 = vunpack.c.l.b16 %v1228
        %v1418 = vpack.c.b16 %v1417, %v1416
        %v1420 = vsel %vm1250, %v1212, 0
        %v1423 = vsel %vm1250, %v1418, 0
        %1425 = vmatpush.bf16.xpose.msra.mxu0 0
        %1426 = vmatpush.bf16.xpose.msra.mxu0 0
        %1427 = vmatpush.bf16.xpose.msra.mxu0 0
        %1428 = vmatpush.bf16.xpose.msra.mxu0 0
        %1429 = vmatpush.bf16.xpose.msra.mxu0 0
        %1430 = vmatpush.bf16.xpose.msra.mxu0 0
        %1431 = vmatpush.bf16.xpose.msra.mxu0 0
        %1432 = vmatpush.bf16.xpose.msra.mxu0 %v1423
        %1433 = vmatmul.bf16.gmra.mxu0 %v1420
        %v1434 = vpop.f32.mrf.mxu0
        %v1435 = vadd.f32 0.0, %v1434
        %v1436 = vpop.f32.mrf.mxu0
        %1437 = vdwg.mxu0
        %v1438 = vmul.f32 %v1267, 0.25
        %v1439 = vmul.f32 %v1291, 0.25
        %v1440 = vmul.f32 %v1315, 0.25
        %v1441 = vmul.f32 %v1339, 0.25
        %v1442 = vmul.f32 %v1363, 0.25
        %v1443 = vmul.f32 %v1387, 0.25
        %v1444 = vmul.f32 %v1411, 0.25
        %v1445 = vmul.f32 %v1435, 0.25
        %v1446 = vsel %vm1250, %v1438, -inf
        %1447 = vmax.xlane.f32.xlu0 %v1446
        %v1448 = vpop.xlane.xlu0 %1447
        %v1449 = vsel %vm1250, %v1439, -inf
        %1450 = vmax.xlane.f32.xlu0 %v1449
        %v1451 = vpop.xlane.xlu0 %1450
        %v1452 = vsel %vm1250, %v1440, -inf
        %1453 = vmax.xlane.f32.xlu0 %v1452
        %v1454 = vpop.xlane.xlu0 %1453
        %v1455 = vsel %vm1250, %v1441, -inf
        %1456 = vmax.xlane.f32.xlu0 %v1455
        %v1457 = vpop.xlane.xlu0 %1456
        %v1458 = vsel %vm1250, %v1442, -inf
        %1459 = vmax.xlane.f32.xlu0 %v1458
        %v1460 = vpop.xlane.xlu0 %1459
        %v1461 = vsel %vm1250, %v1443, -inf
        %1462 = vmax.xlane.f32.xlu0 %v1461
        %v1463 = vpop.xlane.xlu0 %1462
        %v1464 = vsel %vm1250, %v1444, -inf
        %1465 = vmax.xlane.f32.xlu0 %v1464
        %v1466 = vpop.xlane.xlu0 %1465
        %v1467 = vsel %vm1250, %v1445, -inf
        %1468 = vmax.xlane.f32.xlu0 %v1467
        %v1469 = vpop.xlane.xlu0 %1468
        %v1470 = vsub.f32 %v1438, %v1448
        %v1471 = vsub.f32 %v1439, %v1451
        %v1472 = vsub.f32 %v1440, %v1454
        %v1473 = vsub.f32 %v1441, %v1457
        %v1474 = vsub.f32 %v1442, %v1460
        %v1475 = vsub.f32 %v1443, %v1463
        %v1476 = vsub.f32 %v1444, %v1466
        %v1477 = vsub.f32 %v1445, %v1469
        %v1478 = vmul.f32 %v1470, 1.442695
        %v1479 = vpow.pop %v1478
        %v1480 = vmul.f32 %v1471, 1.442695
        %v1481 = vpow.pop %v1480
        %v1482 = vmul.f32 %v1472, 1.442695
        %v1483 = vpow.pop %v1482
        %v1484 = vmul.f32 %v1473, 1.442695
        %v1485 = vpow.pop %v1484
        %v1486 = vmul.f32 %v1474, 1.442695
        %v1487 = vpow.pop %v1486
        %v1488 = vmul.f32 %v1475, 1.442695
        %v1489 = vpow.pop %v1488
        %v1490 = vmul.f32 %v1476, 1.442695
        %v1491 = vpow.pop %v1490
        %v1492 = vmul.f32 %v1477, 1.442695
        %v1493 = vpow.pop %v1492
        %v1494 = vsel %vm1250, %v1479, 0.0
        %1495 = vadd.xlane.f32.xlu0 %v1494
        %v1496 = vpop.xlane.xlu0 %1495
        %v1497 = vsel %vm1250, %v1481, 0.0
        %1498 = vadd.xlane.f32.xlu0 %v1497
        %v1499 = vpop.xlane.xlu0 %1498
        %v1500 = vsel %vm1250, %v1483, 0.0
        %1501 = vadd.xlane.f32.xlu0 %v1500
        %v1502 = vpop.xlane.xlu0 %1501
        %v1503 = vsel %vm1250, %v1485, 0.0
        %1504 = vadd.xlane.f32.xlu0 %v1503
        %v1505 = vpop.xlane.xlu0 %1504
        %v1506 = vsel %vm1250, %v1487, 0.0
        %1507 = vadd.xlane.f32.xlu0 %v1506
        %v1508 = vpop.xlane.xlu0 %1507
        %v1509 = vsel %vm1250, %v1489, 0.0
        %1510 = vadd.xlane.f32.xlu0 %v1509
        %v1511 = vpop.xlane.xlu0 %1510
        %v1512 = vsel %vm1250, %v1491, 0.0
        %1513 = vadd.xlane.f32.xlu0 %v1512
        %v1514 = vpop.xlane.xlu0 %1513
        %v1515 = vsel %vm1250, %v1493, 0.0
        %1516 = vadd.xlane.f32.xlu0 %v1515
        %v1517 = vpop.xlane.xlu0 %1516
        %v1518 = vpack.c.bf16 %v1479, %v1479
        %v1519 = vpack.c.bf16 %v1481, %v1481
        %v1520 = vpack.c.bf16 %v1483, %v1483
        %v1521 = vpack.c.bf16 %v1485, %v1485
        %v1522 = vpack.c.bf16 %v1487, %v1487
        %v1523 = vpack.c.bf16 %v1489, %v1489
        %v1524 = vpack.c.bf16 %v1491, %v1491
        %v1525 = vpack.c.bf16 %v1493, %v1493
        %v1528 = vunpack.c.l.b16 %v1229
        %v1529 = vunpack.c.l.b16 %v1230
        %v1530 = vpack.c.b16 %v1529, %v1528
        %v1533 = vsel %vm1250, %v1518, 0
        %1535 = vmatpush.bf16.msra.mxu0 0
        %1536 = vmatpush.bf16.msra.mxu0 0
        %1537 = vmatpush.bf16.msra.mxu0 0
        %1538 = vmatpush.bf16.msra.mxu0 0
        %1539 = vmatpush.bf16.msra.mxu0 0
        %1540 = vmatpush.bf16.msra.mxu0 0
        %1541 = vmatpush.bf16.msra.mxu0 0
        %1542 = vmatpush.bf16.msra.mxu0 %v1530
        %1543 = vmatmul.bf16.gmra.mxu0 %v1533
        %v1544 = vpop.f32.mrf.mxu0
        %v1545 = vadd.f32 0.0, %v1544
        %v1546 = vpop.f32.mrf.mxu0
        %1547 = vdwg.mxu0
        %v1550 = vunpack.c.l.b16 %v1231
        %v1551 = vunpack.c.l.b16 %v1232
        %v1552 = vpack.c.b16 %v1551, %v1550
        %v1555 = vsel %vm1250, %v1519, 0
        %1557 = vmatpush.bf16.msra.mxu0 0
        %1558 = vmatpush.bf16.msra.mxu0 0
        %1559 = vmatpush.bf16.msra.mxu0 0
        %1560 = vmatpush.bf16.msra.mxu0 0
        %1561 = vmatpush.bf16.msra.mxu0 0
        %1562 = vmatpush.bf16.msra.mxu0 0
        %1563 = vmatpush.bf16.msra.mxu0 0
        %1564 = vmatpush.bf16.msra.mxu0 %v1552
        %1565 = vmatmul.bf16.gmra.mxu0 %v1555
        %v1566 = vpop.f32.mrf.mxu0
        %v1567 = vadd.f32 0.0, %v1566
        %v1568 = vpop.f32.mrf.mxu0
        %1569 = vdwg.mxu0
        %v1572 = vunpack.c.l.b16 %v1233
        %v1573 = vunpack.c.l.b16 %v1234
        %v1574 = vpack.c.b16 %v1573, %v1572
        %v1577 = vsel %vm1250, %v1520, 0
        %1579 = vmatpush.bf16.msra.mxu0 0
        %1580 = vmatpush.bf16.msra.mxu0 0
        %1581 = vmatpush.bf16.msra.mxu0 0
        %1582 = vmatpush.bf16.msra.mxu0 0
        %1583 = vmatpush.bf16.msra.mxu0 0
        %1584 = vmatpush.bf16.msra.mxu0 0
        %1585 = vmatpush.bf16.msra.mxu0 0
        %1586 = vmatpush.bf16.msra.mxu0 %v1574
        %1587 = vmatmul.bf16.gmra.mxu0 %v1577
        %v1588 = vpop.f32.mrf.mxu0
        %v1589 = vadd.f32 0.0, %v1588
        %v1590 = vpop.f32.mrf.mxu0
        %1591 = vdwg.mxu0
        %v1594 = vunpack.c.l.b16 %v1235
        %v1595 = vunpack.c.l.b16 %v1236
        %v1596 = vpack.c.b16 %v1595, %v1594
        %v1599 = vsel %vm1250, %v1521, 0
        %1601 = vmatpush.bf16.msra.mxu0 0
        %1602 = vmatpush.bf16.msra.mxu0 0
        %1603 = vmatpush.bf16.msra.mxu0 0
        %1604 = vmatpush.bf16.msra.mxu0 0
        %1605 = vmatpush.bf16.msra.mxu0 0
        %1606 = vmatpush.bf16.msra.mxu0 0
        %1607 = vmatpush.bf16.msra.mxu0 0
        %1608 = vmatpush.bf16.msra.mxu0 %v1596
        %1609 = vmatmul.bf16.gmra.mxu0 %v1599
        %v1610 = vpop.f32.mrf.mxu0
        %v1611 = vadd.f32 0.0, %v1610
        %v1612 = vpop.f32.mrf.mxu0
        %1613 = vdwg.mxu0
        %v1616 = vunpack.c.l.b16 %v1237
        %v1617 = vunpack.c.l.b16 %v1238
        %v1618 = vpack.c.b16 %v1617, %v1616
        %v1621 = vsel %vm1250, %v1522, 0
        %1623 = vmatpush.bf16.msra.mxu0 0
        %1624 = vmatpush.bf16.msra.mxu0 0
        %1625 = vmatpush.bf16.msra.mxu0 0
        %1626 = vmatpush.bf16.msra.mxu0 0
        %1627 = vmatpush.bf16.msra.mxu0 0
        %1628 = vmatpush.bf16.msra.mxu0 0
        %1629 = vmatpush.bf16.msra.mxu0 0
        %1630 = vmatpush.bf16.msra.mxu0 %v1618
        %1631 = vmatmul.bf16.gmra.mxu0 %v1621
        %v1632 = vpop.f32.mrf.mxu0
        %v1633 = vadd.f32 0.0, %v1632
        %v1634 = vpop.f32.mrf.mxu0
        %1635 = vdwg.mxu0
        %v1638 = vunpack.c.l.b16 %v1239
        %v1639 = vunpack.c.l.b16 %v1240
        %v1640 = vpack.c.b16 %v1639, %v1638
        %v1643 = vsel %vm1250, %v1523, 0
        %1645 = vmatpush.bf16.msra.mxu0 0
        %1646 = vmatpush.bf16.msra.mxu0 0
        %1647 = vmatpush.bf16.msra.mxu0 0
        %1648 = vmatpush.bf16.msra.mxu0 0
        %1649 = vmatpush.bf16.msra.mxu0 0
        %1650 = vmatpush.bf16.msra.mxu0 0
        %1651 = vmatpush.bf16.msra.mxu0 0
        %1652 = vmatpush.bf16.msra.mxu0 %v1640
        %1653 = vmatmul.bf16.gmra.mxu0 %v1643
        %v1654 = vpop.f32.mrf.mxu0
        %v1655 = vadd.f32 0.0, %v1654
        %v1656 = vpop.f32.mrf.mxu0
        %1657 = vdwg.mxu0
        %v1660 = vunpack.c.l.b16 %v1241
        %v1661 = vunpack.c.l.b16 %v1242
        %v1662 = vpack.c.b16 %v1661, %v1660
        %v1665 = vsel %vm1250, %v1524, 0
        %1667 = vmatpush.bf16.msra.mxu0 0
        %1668 = vmatpush.bf16.msra.mxu0 0
        %1669 = vmatpush.bf16.msra.mxu0 0
        %1670 = vmatpush.bf16.msra.mxu0 0
        %1671 = vmatpush.bf16.msra.mxu0 0
        %1672 = vmatpush.bf16.msra.mxu0 0
        %1673 = vmatpush.bf16.msra.mxu0 0
        %1674 = vmatpush.bf16.msra.mxu0 %v1662
        %1675 = vmatmul.bf16.gmra.mxu0 %v1665
        %v1676 = vpop.f32.mrf.mxu0
        %v1677 = vadd.f32 0.0, %v1676
        %v1678 = vpop.f32.mrf.mxu0
        %1679 = vdwg.mxu0
        %v1682 = vunpack.c.l.b16 %v1243
        %v1683 = vunpack.c.l.b16 %v1244
        %v1684 = vpack.c.b16 %v1683, %v1682
        %v1687 = vsel %vm1250, %v1525, 0
        %1689 = vmatpush.bf16.msra.mxu0 0
        %1690 = vmatpush.bf16.msra.mxu0 0
        %1691 = vmatpush.bf16.msra.mxu0 0
        %1692 = vmatpush.bf16.msra.mxu0 0
        %1693 = vmatpush.bf16.msra.mxu0 0
        %1694 = vmatpush.bf16.msra.mxu0 0
        %1695 = vmatpush.bf16.msra.mxu0 0
        %1696 = vmatpush.bf16.msra.mxu0 %v1684
        %1697 = vmatmul.bf16.gmra.mxu0 %v1687
        %v1698 = vpop.f32.mrf.mxu0
        %v1699 = vadd.f32 0.0, %v1698
        %v1700 = vpop.f32.mrf.mxu0
        %1701 = vdwg.mxu0
        %v1702 = vrcp.pop %v1496
        %v1703 = vmul.f32 %v1496, %v1702
        %v1704 = vsub.f32 1.0, %v1703
        %v1705 = vmul.f32 %v1702, %v1704
        %v1706 = vadd.f32 %v1702, %v1705
        %vm1707 = vweird.f32 %v1496
        %vm1708 = vweird.f32 %v1702
        %vm1709 = vmor %vm1707, %vm1708
        %v1710 = vsel %vm1709, %v1702, %v1706
        %v1711 = vand.u32 2147483647, %v1496
        %vm1712 = vcmp.eq.f32.partialorder %v1711, 8.507059e+37
        %v1713 = vand.u32 %v1496, 2147483648
        %v1714 = vor.u32 1.1754944e-38, %v1713
        %v1715 = vsel %vm1712, %v1714, %v1710
        %v1716 = vmul.f32 %v1545, %v1715
        %v1717 = vrcp.pop %v1499
        %v1718 = vmul.f32 %v1499, %v1717
        %v1719 = vsub.f32 1.0, %v1718
        %v1720 = vmul.f32 %v1717, %v1719
        %v1721 = vadd.f32 %v1717, %v1720
        %vm1722 = vweird.f32 %v1499
        %vm1723 = vweird.f32 %v1717
        %vm1724 = vmor %vm1722, %vm1723
        %v1725 = vsel %vm1724, %v1717, %v1721
        %v1726 = vand.u32 2147483647, %v1499
        %vm1727 = vcmp.eq.f32.partialorder %v1726, 8.507059e+37
        %v1728 = vand.u32 %v1499, 2147483648
        %v1729 = vor.u32 1.1754944e-38, %v1728
        %v1730 = vsel %vm1727, %v1729, %v1725
        %v1731 = vmul.f32 %v1567, %v1730
        %v1732 = vrcp.pop %v1502
        %v1733 = vmul.f32 %v1502, %v1732
        %v1734 = vsub.f32 1.0, %v1733
        %v1735 = vmul.f32 %v1732, %v1734
        %v1736 = vadd.f32 %v1732, %v1735
        %vm1737 = vweird.f32 %v1502
        %vm1738 = vweird.f32 %v1732
        %vm1739 = vmor %vm1737, %vm1738
        %v1740 = vsel %vm1739, %v1732, %v1736
        %v1741 = vand.u32 2147483647, %v1502
        %vm1742 = vcmp.eq.f32.partialorder %v1741, 8.507059e+37
        %v1743 = vand.u32 %v1502, 2147483648
        %v1744 = vor.u32 1.1754944e-38, %v1743
        %v1745 = vsel %vm1742, %v1744, %v1740
        %v1746 = vmul.f32 %v1589, %v1745
        %v1747 = vrcp.pop %v1505
        %v1748 = vmul.f32 %v1505, %v1747
        %v1749 = vsub.f32 1.0, %v1748
        %v1750 = vmul.f32 %v1747, %v1749
        %v1751 = vadd.f32 %v1747, %v1750
        %vm1752 = vweird.f32 %v1505
        %vm1753 = vweird.f32 %v1747
        %vm1754 = vmor %vm1752, %vm1753
        %v1755 = vsel %vm1754, %v1747, %v1751
        %v1756 = vand.u32 2147483647, %v1505
        %vm1757 = vcmp.eq.f32.partialorder %v1756, 8.507059e+37
        %v1758 = vand.u32 %v1505, 2147483648
        %v1759 = vor.u32 1.1754944e-38, %v1758
        %v1760 = vsel %vm1757, %v1759, %v1755
        %v1761 = vmul.f32 %v1611, %v1760
        %v1762 = vrcp.pop %v1508
        %v1763 = vmul.f32 %v1508, %v1762
        %v1764 = vsub.f32 1.0, %v1763
        %v1765 = vmul.f32 %v1762, %v1764
        %v1766 = vadd.f32 %v1762, %v1765
        %vm1767 = vweird.f32 %v1508
        %vm1768 = vweird.f32 %v1762
        %vm1769 = vmor %vm1767, %vm1768
        %v1770 = vsel %vm1769, %v1762, %v1766
        %v1771 = vand.u32 2147483647, %v1508
        %vm1772 = vcmp.eq.f32.partialorder %v1771, 8.507059e+37
        %v1773 = vand.u32 %v1508, 2147483648
        %v1774 = vor.u32 1.1754944e-38, %v1773
        %v1775 = vsel %vm1772, %v1774, %v1770
        %v1776 = vmul.f32 %v1633, %v1775
        %v1777 = vrcp.pop %v1511
        %v1778 = vmul.f32 %v1511, %v1777
        %v1779 = vsub.f32 1.0, %v1778
        %v1780 = vmul.f32 %v1777, %v1779
        %v1781 = vadd.f32 %v1777, %v1780
        %vm1782 = vweird.f32 %v1511
        %vm1783 = vweird.f32 %v1777
        %vm1784 = vmor %vm1782, %vm1783
        %v1785 = vsel %vm1784, %v1777, %v1781
        %v1786 = vand.u32 2147483647, %v1511
        %vm1787 = vcmp.eq.f32.partialorder %v1786, 8.507059e+37
        %v1788 = vand.u32 %v1511, 2147483648
        %v1789 = vor.u32 1.1754944e-38, %v1788
        %v1790 = vsel %vm1787, %v1789, %v1785
        %v1791 = vmul.f32 %v1655, %v1790
        %v1792 = vrcp.pop %v1514
        %v1793 = vmul.f32 %v1514, %v1792
        %v1794 = vsub.f32 1.0, %v1793
        %v1795 = vmul.f32 %v1792, %v1794
        %v1796 = vadd.f32 %v1792, %v1795
        %vm1797 = vweird.f32 %v1514
        %vm1798 = vweird.f32 %v1792
        %vm1799 = vmor %vm1797, %vm1798
        %v1800 = vsel %vm1799, %v1792, %v1796
        %v1801 = vand.u32 2147483647, %v1514
        %vm1802 = vcmp.eq.f32.partialorder %v1801, 8.507059e+37
        %v1803 = vand.u32 %v1514, 2147483648
        %v1804 = vor.u32 1.1754944e-38, %v1803
        %v1805 = vsel %vm1802, %v1804, %v1800
        %v1806 = vmul.f32 %v1677, %v1805
        %v1807 = vrcp.pop %v1517
        %v1808 = vmul.f32 %v1517, %v1807
        %v1809 = vsub.f32 1.0, %v1808
        %v1810 = vmul.f32 %v1807, %v1809
        %v1811 = vadd.f32 %v1807, %v1810
        %vm1812 = vweird.f32 %v1517
        %vm1813 = vweird.f32 %v1807
        %vm1814 = vmor %vm1812, %vm1813
        %v1815 = vsel %vm1814, %v1807, %v1811
        %v1816 = vand.u32 2147483647, %v1517
        %vm1817 = vcmp.eq.f32.partialorder %v1816, 8.507059e+37
        %v1818 = vand.u32 %v1517, 2147483648
        %v1819 = vor.u32 1.1754944e-38, %v1818
        %v1820 = vsel %vm1817, %v1819, %v1815
        %v1821 = vmul.f32 %v1699, %v1820
        %v1823 = vunpack.c.l.b16 %v1205
        %v1824 = vpack.c.b16 %v1823, %v1823
        %1825 = vrot.lane.b32.xlu0 %v1824, 112
        %v1826 = vpop.permute.xlu0 %1825
        %1827 = vrot.lane.b32.xlu0 %v1249, 112
        %v1828 = vpop.permute.xlu0 %1827
        %v1830 = vsel %vm1250, %v1826, 0
        %v1833 = vsel %vm1250, %v1828, 0
        %1835 = vmatpush.bf16.xpose.msra.mxu0 0
        %1836 = vmatpush.bf16.xpose.msra.mxu0 0
        %1837 = vmatpush.bf16.xpose.msra.mxu0 0
        %1838 = vmatpush.bf16.xpose.msra.mxu0 0
        %1839 = vmatpush.bf16.xpose.msra.mxu0 0
        %1840 = vmatpush.bf16.xpose.msra.mxu0 0
        %1841 = vmatpush.bf16.xpose.msra.mxu0 0
        %1842 = vmatpush.bf16.xpose.msra.mxu0 %v1833
        %1843 = vmatmul.bf16.gmra.mxu0 %v1830
        %v1844 = vpop.f32.mrf.mxu0
        %v1845 = vadd.f32 0.0, %v1844
        %v1846 = vpop.f32.mrf.mxu0
        %1847 = vdwg.mxu0
        %v1849 = vunpack.c.l.b16 %v1206
        %v1850 = vpack.c.b16 %v1849, %v1849
        %1851 = vrot.lane.b32.xlu0 %v1850, 112
        %v1852 = vpop.permute.xlu0 %1851
        %1853 = vrot.lane.b32.xlu0 %v1274, 112
        %v1854 = vpop.permute.xlu0 %1853
        %v1856 = vsel %vm1250, %v1852, 0
        %v1859 = vsel %vm1250, %v1854, 0
        %1861 = vmatpush.bf16.xpose.msra.mxu0 0
        %1862 = vmatpush.bf16.xpose.msra.mxu0 0
        %1863 = vmatpush.bf16.xpose.msra.mxu0 0
        %1864 = vmatpush.bf16.xpose.msra.mxu0 0
        %1865 = vmatpush.bf16.xpose.msra.mxu0 0
        %1866 = vmatpush.bf16.xpose.msra.mxu0 0
        %1867 = vmatpush.bf16.xpose.msra.mxu0 0
        %1868 = vmatpush.bf16.xpose.msra.mxu0 %v1859
        %1869 = vmatmul.bf16.gmra.mxu0 %v1856
        %v1870 = vpop.f32.mrf.mxu0
        %v1871 = vadd.f32 0.0, %v1870
        %v1872 = vpop.f32.mrf.mxu0
        %1873 = vdwg.mxu0
        %v1875 = vunpack.c.l.b16 %v1207
        %v1876 = vpack.c.b16 %v1875, %v1875
        %1877 = vrot.lane.b32.xlu0 %v1876, 112
        %v1878 = vpop.permute.xlu0 %1877
        %1879 = vrot.lane.b32.xlu0 %v1298, 112
        %v1880 = vpop.permute.xlu0 %1879
        %v1882 = vsel %vm1250, %v1878, 0
        %v1885 = vsel %vm1250, %v1880, 0
        %1887 = vmatpush.bf16.xpose.msra.mxu0 0
        %1888 = vmatpush.bf16.xpose.msra.mxu0 0
        %1889 = vmatpush.bf16.xpose.msra.mxu0 0
        %1890 = vmatpush.bf16.xpose.msra.mxu0 0
        %1891 = vmatpush.bf16.xpose.msra.mxu0 0
        %1892 = vmatpush.bf16.xpose.msra.mxu0 0
        %1893 = vmatpush.bf16.xpose.msra.mxu0 0
        %1894 = vmatpush.bf16.xpose.msra.mxu0 %v1885
        %1895 = vmatmul.bf16.gmra.mxu0 %v1882
        %v1896 = vpop.f32.mrf.mxu0
        %v1897 = vadd.f32 0.0, %v1896
        %v1898 = vpop.f32.mrf.mxu0
        %1899 = vdwg.mxu0
        %v1901 = vunpack.c.l.b16 %v1208
        %v1902 = vpack.c.b16 %v1901, %v1901
        %1903 = vrot.lane.b32.xlu0 %v1902, 112
        %v1904 = vpop.permute.xlu0 %1903
        %1905 = vrot.lane.b32.xlu0 %v1322, 112
        %v1906 = vpop.permute.xlu0 %1905
        %v1908 = vsel %vm1250, %v1904, 0
        %v1911 = vsel %vm1250, %v1906, 0
        %1913 = vmatpush.bf16.xpose.msra.mxu0 0
        %1914 = vmatpush.bf16.xpose.msra.mxu0 0
        %1915 = vmatpush.bf16.xpose.msra.mxu0 0
        %1916 = vmatpush.bf16.xpose.msra.mxu0 0
        %1917 = vmatpush.bf16.xpose.msra.mxu0 0
        %1918 = vmatpush.bf16.xpose.msra.mxu0 0
        %1919 = vmatpush.bf16.xpose.msra.mxu0 0
        %1920 = vmatpush.bf16.xpose.msra.mxu0 %v1911
        %1921 = vmatmul.bf16.gmra.mxu0 %v1908
        %v1922 = vpop.f32.mrf.mxu0
        %v1923 = vadd.f32 0.0, %v1922
        %v1924 = vpop.f32.mrf.mxu0
        %1925 = vdwg.mxu0
        %v1927 = vunpack.c.l.b16 %v1209
        %v1928 = vpack.c.b16 %v1927, %v1927
        %1929 = vrot.lane.b32.xlu0 %v1928, 112
        %v1930 = vpop.permute.xlu0 %1929
        %1931 = vrot.lane.b32.xlu0 %v1346, 112
        %v1932 = vpop.permute.xlu0 %1931
        %v1934 = vsel %vm1250, %v1930, 0
        %v1937 = vsel %vm1250, %v1932, 0
        %1939 = vmatpush.bf16.xpose.msra.mxu0 0
        %1940 = vmatpush.bf16.xpose.msra.mxu0 0
        %1941 = vmatpush.bf16.xpose.msra.mxu0 0
        %1942 = vmatpush.bf16.xpose.msra.mxu0 0
        %1943 = vmatpush.bf16.xpose.msra.mxu0 0
        %1944 = vmatpush.bf16.xpose.msra.mxu0 0
        %1945 = vmatpush.bf16.xpose.msra.mxu0 0
        %1946 = vmatpush.bf16.xpose.msra.mxu0 %v1937
        %1947 = vmatmul.bf16.gmra.mxu0 %v1934
        %v1948 = vpop.f32.mrf.mxu0
        %v1949 = vadd.f32 0.0, %v1948
        %v1950 = vpop.f32.mrf.mxu0
        %1951 = vdwg.mxu0
        %v1953 = vunpack.c.l.b16 %v1210
        %v1954 = vpack.c.b16 %v1953, %v1953
        %1955 = vrot.lane.b32.xlu0 %v1954, 112
        %v1956 = vpop.permute.xlu0 %1955
        %1957 = vrot.lane.b32.xlu0 %v1370, 112
        %v1958 = vpop.permute.xlu0 %1957
        %v1960 = vsel %vm1250, %v1956, 0
        %v1963 = vsel %vm1250, %v1958, 0
        %1965 = vmatpush.bf16.xpose.msra.mxu0 0
        %1966 = vmatpush.bf16.xpose.msra.mxu0 0
        %1967 = vmatpush.bf16.xpose.msra.mxu0 0
        %1968 = vmatpush.bf16.xpose.msra.mxu0 0
        %1969 = vmatpush.bf16.xpose.msra.mxu0 0
        %1970 = vmatpush.bf16.xpose.msra.mxu0 0
        %1971 = vmatpush.bf16.xpose.msra.mxu0 0
        %1972 = vmatpush.bf16.xpose.msra.mxu0 %v1963
        %1973 = vmatmul.bf16.gmra.mxu0 %v1960
        %v1974 = vpop.f32.mrf.mxu0
        %v1975 = vadd.f32 0.0, %v1974
        %v1976 = vpop.f32.mrf.mxu0
        %1977 = vdwg.mxu0
        %v1979 = vunpack.c.l.b16 %v1211
        %v1980 = vpack.c.b16 %v1979, %v1979
        %1981 = vrot.lane.b32.xlu0 %v1980, 112
        %v1982 = vpop.permute.xlu0 %1981
        %1983 = vrot.lane.b32.xlu0 %v1394, 112
        %v1984 = vpop.permute.xlu0 %1983
        %v1986 = vsel %vm1250, %v1982, 0
        %v1989 = vsel %vm1250, %v1984, 0
        %1991 = vmatpush.bf16.xpose.msra.mxu0 0
        %1992 = vmatpush.bf16.xpose.msra.mxu0 0
        %1993 = vmatpush.bf16.xpose.msra.mxu0 0
        %1994 = vmatpush.bf16.xpose.msra.mxu0 0
        %1995 = vmatpush.bf16.xpose.msra.mxu0 0
        %1996 = vmatpush.bf16.xpose.msra.mxu0 0
        %1997 = vmatpush.bf16.xpose.msra.mxu0 0
        %1998 = vmatpush.bf16.xpose.msra.mxu0 %v1989
        %1999 = vmatmul.bf16.gmra.mxu0 %v1986
        %v2000 = vpop.f32.mrf.mxu0
        %v2001 = vadd.f32 0.0, %v2000
        %v2002 = vpop.f32.mrf.mxu0
        %2003 = vdwg.mxu0
        %v2005 = vunpack.c.l.b16 %v1212
        %v2006 = vpack.c.b16 %v2005, %v2005
        %2007 = vrot.lane.b32.xlu0 %v2006, 112
        %v2008 = vpop.permute.xlu0 %2007
        %2009 = vrot.lane.b32.xlu0 %v1418, 112
        %v2010 = vpop.permute.xlu0 %2009
        %v2012 = vsel %vm1250, %v2008, 0
        %v2015 = vsel %vm1250, %v2010, 0
        %2017 = vmatpush.bf16.xpose.msra.mxu0 0
        %2018 = vmatpush.bf16.xpose.msra.mxu0 0
        %2019 = vmatpush.bf16.xpose.msra.mxu0 0
        %2020 = vmatpush.bf16.xpose.msra.mxu0 0
        %2021 = vmatpush.bf16.xpose.msra.mxu0 0
        %2022 = vmatpush.bf16.xpose.msra.mxu0 0
        %2023 = vmatpush.bf16.xpose.msra.mxu0 0
        %2024 = vmatpush.bf16.xpose.msra.mxu0 %v2015
        %2025 = vmatmul.bf16.gmra.mxu0 %v2012
        %v2026 = vpop.f32.mrf.mxu0
        %v2027 = vadd.f32 0.0, %v2026
        %v2028 = vpop.f32.mrf.mxu0
        %2029 = vdwg.mxu0
        %v2030 = vmul.f32 %v1845, 0.25
        %v2031 = vmul.f32 %v1871, 0.25
        %v2032 = vmul.f32 %v1897, 0.25
        %v2033 = vmul.f32 %v1923, 0.25
        %v2034 = vmul.f32 %v1949, 0.25
        %v2035 = vmul.f32 %v1975, 0.25
        %v2036 = vmul.f32 %v2001, 0.25
        %v2037 = vmul.f32 %v2027, 0.25
        %v2038 = vsel %vm1250, %v2030, -inf
        %2039 = vmax.xlane.f32.xlu0 %v2038
        %v2040 = vpop.xlane.xlu0 %2039
        %v2041 = vsel %vm1250, %v2031, -inf
        %2042 = vmax.xlane.f32.xlu0 %v2041
        %v2043 = vpop.xlane.xlu0 %2042
        %v2044 = vsel %vm1250, %v2032, -inf
        %2045 = vmax.xlane.f32.xlu0 %v2044
        %v2046 = vpop.xlane.xlu0 %2045
        %v2047 = vsel %vm1250, %v2033, -inf
        %2048 = vmax.xlane.f32.xlu0 %v2047
        %v2049 = vpop.xlane.xlu0 %2048
        %v2050 = vsel %vm1250, %v2034, -inf
        %2051 = vmax.xlane.f32.xlu0 %v2050
        %v2052 = vpop.xlane.xlu0 %2051
        %v2053 = vsel %vm1250, %v2035, -inf
        %2054 = vmax.xlane.f32.xlu0 %v2053
        %v2055 = vpop.xlane.xlu0 %2054
        %v2056 = vsel %vm1250, %v2036, -inf
        %2057 = vmax.xlane.f32.xlu0 %v2056
        %v2058 = vpop.xlane.xlu0 %2057
        %v2059 = vsel %vm1250, %v2037, -inf
        %2060 = vmax.xlane.f32.xlu0 %v2059
        %v2061 = vpop.xlane.xlu0 %2060
        %v2062 = vsub.f32 %v2030, %v2040
        %v2063 = vsub.f32 %v2031, %v2043
        %v2064 = vsub.f32 %v2032, %v2046
        %v2065 = vsub.f32 %v2033, %v2049
        %v2066 = vsub.f32 %v2034, %v2052
        %v2067 = vsub.f32 %v2035, %v2055
        %v2068 = vsub.f32 %v2036, %v2058
        %v2069 = vsub.f32 %v2037, %v2061
        %v2070 = vmul.f32 %v2062, 1.442695
        %v2071 = vpow.pop %v2070
        %v2072 = vmul.f32 %v2063, 1.442695
        %v2073 = vpow.pop %v2072
        %v2074 = vmul.f32 %v2064, 1.442695
        %v2075 = vpow.pop %v2074
        %v2076 = vmul.f32 %v2065, 1.442695
        %v2077 = vpow.pop %v2076
        %v2078 = vmul.f32 %v2066, 1.442695
        %v2079 = vpow.pop %v2078
        %v2080 = vmul.f32 %v2067, 1.442695
        %v2081 = vpow.pop %v2080
        %v2082 = vmul.f32 %v2068, 1.442695
        %v2083 = vpow.pop %v2082
        %v2084 = vmul.f32 %v2069, 1.442695
        %v2085 = vpow.pop %v2084
        %v2086 = vsel %vm1250, %v2071, 0.0
        %2087 = vadd.xlane.f32.xlu0 %v2086
        %v2088 = vpop.xlane.xlu0 %2087
        %v2089 = vsel %vm1250, %v2073, 0.0
        %2090 = vadd.xlane.f32.xlu0 %v2089
        %v2091 = vpop.xlane.xlu0 %2090
        %v2092 = vsel %vm1250, %v2075, 0.0
        %2093 = vadd.xlane.f32.xlu0 %v2092
        %v2094 = vpop.xlane.xlu0 %2093
        %v2095 = vsel %vm1250, %v2077, 0.0
        %2096 = vadd.xlane.f32.xlu0 %v2095
        %v2097 = vpop.xlane.xlu0 %2096
        %v2098 = vsel %vm1250, %v2079, 0.0
        %2099 = vadd.xlane.f32.xlu0 %v2098
        %v2100 = vpop.xlane.xlu0 %2099
        %v2101 = vsel %vm1250, %v2081, 0.0
        %2102 = vadd.xlane.f32.xlu0 %v2101
        %v2103 = vpop.xlane.xlu0 %2102
        %v2104 = vsel %vm1250, %v2083, 0.0
        %2105 = vadd.xlane.f32.xlu0 %v2104
        %v2106 = vpop.xlane.xlu0 %2105
        %v2107 = vsel %vm1250, %v2085, 0.0
        %2108 = vadd.xlane.f32.xlu0 %v2107
        %v2109 = vpop.xlane.xlu0 %2108
        %v2110 = vpack.c.bf16 %v2071, %v2071
        %v2111 = vpack.c.bf16 %v2073, %v2073
        %v2112 = vpack.c.bf16 %v2075, %v2075
        %v2113 = vpack.c.bf16 %v2077, %v2077
        %v2114 = vpack.c.bf16 %v2079, %v2079
        %v2115 = vpack.c.bf16 %v2081, %v2081
        %v2116 = vpack.c.bf16 %v2083, %v2083
        %v2117 = vpack.c.bf16 %v2085, %v2085
        %2118 = vrot.lane.b32.xlu0 %v1530, 112
        %v2119 = vpop.permute.xlu0 %2118
        %v2122 = vsel %vm1250, %v2110, 0
        %2124 = vmatpush.bf16.msra.mxu0 0
        %2125 = vmatpush.bf16.msra.mxu0 0
        %2126 = vmatpush.bf16.msra.mxu0 0
        %2127 = vmatpush.bf16.msra.mxu0 0
        %2128 = vmatpush.bf16.msra.mxu0 0
        %2129 = vmatpush.bf16.msra.mxu0 0
        %2130 = vmatpush.bf16.msra.mxu0 0
        %2131 = vmatpush.bf16.msra.mxu0 %v2119
        %2132 = vmatmul.bf16.gmra.mxu0 %v2122
        %v2133 = vpop.f32.mrf.mxu0
        %v2134 = vadd.f32 0.0, %v2133
        %v2135 = vpop.f32.mrf.mxu0
        %2136 = vdwg.mxu0
        %2137 = vrot.lane.b32.xlu0 %v1552, 112
        %v2138 = vpop.permute.xlu0 %2137
        %v2141 = vsel %vm1250, %v2111, 0
        %2143 = vmatpush.bf16.msra.mxu0 0
        %2144 = vmatpush.bf16.msra.mxu0 0
        %2145 = vmatpush.bf16.msra.mxu0 0
        %2146 = vmatpush.bf16.msra.mxu0 0
        %2147 = vmatpush.bf16.msra.mxu0 0
        %2148 = vmatpush.bf16.msra.mxu0 0
        %2149 = vmatpush.bf16.msra.mxu0 0
        %2150 = vmatpush.bf16.msra.mxu0 %v2138
        %2151 = vmatmul.bf16.gmra.mxu0 %v2141
        %v2152 = vpop.f32.mrf.mxu0
        %v2153 = vadd.f32 0.0, %v2152
        %v2154 = vpop.f32.mrf.mxu0
        %2155 = vdwg.mxu0
        %2156 = vrot.lane.b32.xlu0 %v1574, 112
        %v2157 = vpop.permute.xlu0 %2156
        %v2160 = vsel %vm1250, %v2112, 0
        %2162 = vmatpush.bf16.msra.mxu0 0
        %2163 = vmatpush.bf16.msra.mxu0 0
        %2164 = vmatpush.bf16.msra.mxu0 0
        %2165 = vmatpush.bf16.msra.mxu0 0
        %2166 = vmatpush.bf16.msra.mxu0 0
        %2167 = vmatpush.bf16.msra.mxu0 0
        %2168 = vmatpush.bf16.msra.mxu0 0
        %2169 = vmatpush.bf16.msra.mxu0 %v2157
        %2170 = vmatmul.bf16.gmra.mxu0 %v2160
        %v2171 = vpop.f32.mrf.mxu0
        %v2172 = vadd.f32 0.0, %v2171
        %v2173 = vpop.f32.mrf.mxu0
        %2174 = vdwg.mxu0
        %2175 = vrot.lane.b32.xlu0 %v1596, 112
        %v2176 = vpop.permute.xlu0 %2175
        %v2179 = vsel %vm1250, %v2113, 0
        %2181 = vmatpush.bf16.msra.mxu0 0
        %2182 = vmatpush.bf16.msra.mxu0 0
        %2183 = vmatpush.bf16.msra.mxu0 0
        %2184 = vmatpush.bf16.msra.mxu0 0
        %2185 = vmatpush.bf16.msra.mxu0 0
        %2186 = vmatpush.bf16.msra.mxu0 0
        %2187 = vmatpush.bf16.msra.mxu0 0
        %2188 = vmatpush.bf16.msra.mxu0 %v2176
        %2189 = vmatmul.bf16.gmra.mxu0 %v2179
        %v2190 = vpop.f32.mrf.mxu0
        %v2191 = vadd.f32 0.0, %v2190
        %v2192 = vpop.f32.mrf.mxu0
        %2193 = vdwg.mxu0
        %2194 = vrot.lane.b32.xlu0 %v1618, 112
        %v2195 = vpop.permute.xlu0 %2194
        %v2198 = vsel %vm1250, %v2114, 0
        %2200 = vmatpush.bf16.msra.mxu0 0
        %2201 = vmatpush.bf16.msra.mxu0 0
        %2202 = vmatpush.bf16.msra.mxu0 0
        %2203 = vmatpush.bf16.msra.mxu0 0
        %2204 = vmatpush.bf16.msra.mxu0 0
        %2205 = vmatpush.bf16.msra.mxu0 0
        %2206 = vmatpush.bf16.msra.mxu0 0
        %2207 = vmatpush.bf16.msra.mxu0 %v2195
        %2208 = vmatmul.bf16.gmra.mxu0 %v2198
        %v2209 = vpop.f32.mrf.mxu0
        %v2210 = vadd.f32 0.0, %v2209
        %v2211 = vpop.f32.mrf.mxu0
        %2212 = vdwg.mxu0
        %2213 = vrot.lane.b32.xlu0 %v1640, 112
        %v2214 = vpop.permute.xlu0 %2213
        %v2217 = vsel %vm1250, %v2115, 0
        %2219 = vmatpush.bf16.msra.mxu0 0
        %2220 = vmatpush.bf16.msra.mxu0 0
        %2221 = vmatpush.bf16.msra.mxu0 0
        %2222 = vmatpush.bf16.msra.mxu0 0
        %2223 = vmatpush.bf16.msra.mxu0 0
        %2224 = vmatpush.bf16.msra.mxu0 0
        %2225 = vmatpush.bf16.msra.mxu0 0
        %2226 = vmatpush.bf16.msra.mxu0 %v2214
        %2227 = vmatmul.bf16.gmra.mxu0 %v2217
        %v2228 = vpop.f32.mrf.mxu0
        %v2229 = vadd.f32 0.0, %v2228
        %v2230 = vpop.f32.mrf.mxu0
        %2231 = vdwg.mxu0
        %2232 = vrot.lane.b32.xlu0 %v1662, 112
        %v2233 = vpop.permute.xlu0 %2232
        %v2236 = vsel %vm1250, %v2116, 0
        %2238 = vmatpush.bf16.msra.mxu0 0
        %2239 = vmatpush.bf16.msra.mxu0 0
        %2240 = vmatpush.bf16.msra.mxu0 0
        %2241 = vmatpush.bf16.msra.mxu0 0
        %2242 = vmatpush.bf16.msra.mxu0 0
        %2243 = vmatpush.bf16.msra.mxu0 0
        %2244 = vmatpush.bf16.msra.mxu0 0
        %2245 = vmatpush.bf16.msra.mxu0 %v2233
        %2246 = vmatmul.bf16.gmra.mxu0 %v2236
        %v2247 = vpop.f32.mrf.mxu0
        %v2248 = vadd.f32 0.0, %v2247
        %v2249 = vpop.f32.mrf.mxu0
        %2250 = vdwg.mxu0
        %2251 = vrot.lane.b32.xlu0 %v1684, 112
        %v2252 = vpop.permute.xlu0 %2251
        %v2255 = vsel %vm1250, %v2117, 0
        %2257 = vmatpush.bf16.msra.mxu0 0
        %2258 = vmatpush.bf16.msra.mxu0 0
        %2259 = vmatpush.bf16.msra.mxu0 0
        %2260 = vmatpush.bf16.msra.mxu0 0
        %2261 = vmatpush.bf16.msra.mxu0 0
        %2262 = vmatpush.bf16.msra.mxu0 0
        %2263 = vmatpush.bf16.msra.mxu0 0
        %2264 = vmatpush.bf16.msra.mxu0 %v2252
        %2265 = vmatmul.bf16.gmra.mxu0 %v2255
        %v2266 = vpop.f32.mrf.mxu0
        %v2267 = vadd.f32 0.0, %v2266
        %v2268 = vpop.f32.mrf.mxu0
        %2269 = vdwg.mxu0
        %v2270 = vrcp.pop %v2088
        %v2271 = vmul.f32 %v2088, %v2270
        %v2272 = vsub.f32 1.0, %v2271
        %v2273 = vmul.f32 %v2270, %v2272
        %v2274 = vadd.f32 %v2270, %v2273
        %vm2275 = vweird.f32 %v2088
        %vm2276 = vweird.f32 %v2270
        %vm2277 = vmor %vm2275, %vm2276
        %v2278 = vsel %vm2277, %v2270, %v2274
        %v2279 = vand.u32 2147483647, %v2088
        %vm2280 = vcmp.eq.f32.partialorder %v2279, 8.507059e+37
        %v2281 = vand.u32 %v2088, 2147483648
        %v2282 = vor.u32 1.1754944e-38, %v2281
        %v2283 = vsel %vm2280, %v2282, %v2278
        %v2284 = vmul.f32 %v2134, %v2283
        %v2285 = vrcp.pop %v2091
        %v2286 = vmul.f32 %v2091, %v2285
        %v2287 = vsub.f32 1.0, %v2286
        %v2288 = vmul.f32 %v2285, %v2287
        %v2289 = vadd.f32 %v2285, %v2288
        %vm2290 = vweird.f32 %v2091
        %vm2291 = vweird.f32 %v2285
        %vm2292 = vmor %vm2290, %vm2291
        %v2293 = vsel %vm2292, %v2285, %v2289
        %v2294 = vand.u32 2147483647, %v2091
        %vm2295 = vcmp.eq.f32.partialorder %v2294, 8.507059e+37
        %v2296 = vand.u32 %v2091, 2147483648
        %v2297 = vor.u32 1.1754944e-38, %v2296
        %v2298 = vsel %vm2295, %v2297, %v2293
        %v2299 = vmul.f32 %v2153, %v2298
        %v2300 = vrcp.pop %v2094
        %v2301 = vmul.f32 %v2094, %v2300
        %v2302 = vsub.f32 1.0, %v2301
        %v2303 = vmul.f32 %v2300, %v2302
        %v2304 = vadd.f32 %v2300, %v2303
        %vm2305 = vweird.f32 %v2094
        %vm2306 = vweird.f32 %v2300
        %vm2307 = vmor %vm2305, %vm2306
        %v2308 = vsel %vm2307, %v2300, %v2304
        %v2309 = vand.u32 2147483647, %v2094
        %vm2310 = vcmp.eq.f32.partialorder %v2309, 8.507059e+37
        %v2311 = vand.u32 %v2094, 2147483648
        %v2312 = vor.u32 1.1754944e-38, %v2311
        %v2313 = vsel %vm2310, %v2312, %v2308
        %v2314 = vmul.f32 %v2172, %v2313
        %v2315 = vrcp.pop %v2097
        %v2316 = vmul.f32 %v2097, %v2315
        %v2317 = vsub.f32 1.0, %v2316
        %v2318 = vmul.f32 %v2315, %v2317
        %v2319 = vadd.f32 %v2315, %v2318
        %vm2320 = vweird.f32 %v2097
        %vm2321 = vweird.f32 %v2315
        %vm2322 = vmor %vm2320, %vm2321
        %v2323 = vsel %vm2322, %v2315, %v2319
        %v2324 = vand.u32 2147483647, %v2097
        %vm2325 = vcmp.eq.f32.partialorder %v2324, 8.507059e+37
        %v2326 = vand.u32 %v2097, 2147483648
        %v2327 = vor.u32 1.1754944e-38, %v2326
        %v2328 = vsel %vm2325, %v2327, %v2323
        %v2329 = vmul.f32 %v2191, %v2328
        %v2330 = vrcp.pop %v2100
        %v2331 = vmul.f32 %v2100, %v2330
        %v2332 = vsub.f32 1.0, %v2331
        %v2333 = vmul.f32 %v2330, %v2332
        %v2334 = vadd.f32 %v2330, %v2333
        %vm2335 = vweird.f32 %v2100
        %vm2336 = vweird.f32 %v2330
        %vm2337 = vmor %vm2335, %vm2336
        %v2338 = vsel %vm2337, %v2330, %v2334
        %v2339 = vand.u32 2147483647, %v2100
        %vm2340 = vcmp.eq.f32.partialorder %v2339, 8.507059e+37
        %v2341 = vand.u32 %v2100, 2147483648
        %v2342 = vor.u32 1.1754944e-38, %v2341
        %v2343 = vsel %vm2340, %v2342, %v2338
        %v2344 = vmul.f32 %v2210, %v2343
        %v2345 = vrcp.pop %v2103
        %v2346 = vmul.f32 %v2103, %v2345
        %v2347 = vsub.f32 1.0, %v2346
        %v2348 = vmul.f32 %v2345, %v2347
        %v2349 = vadd.f32 %v2345, %v2348
        %vm2350 = vweird.f32 %v2103
        %vm2351 = vweird.f32 %v2345
        %vm2352 = vmor %vm2350, %vm2351
        %v2353 = vsel %vm2352, %v2345, %v2349
        %v2354 = vand.u32 2147483647, %v2103
        %vm2355 = vcmp.eq.f32.partialorder %v2354, 8.507059e+37
        %v2356 = vand.u32 %v2103, 2147483648
        %v2357 = vor.u32 1.1754944e-38, %v2356
        %v2358 = vsel %vm2355, %v2357, %v2353
        %v2359 = vmul.f32 %v2229, %v2358
        %v2360 = vrcp.pop %v2106
        %v2361 = vmul.f32 %v2106, %v2360
        %v2362 = vsub.f32 1.0, %v2361
        %v2363 = vmul.f32 %v2360, %v2362
        %v2364 = vadd.f32 %v2360, %v2363
        %vm2365 = vweird.f32 %v2106
        %vm2366 = vweird.f32 %v2360
        %vm2367 = vmor %vm2365, %vm2366
        %v2368 = vsel %vm2367, %v2360, %v2364
        %v2369 = vand.u32 2147483647, %v2106
        %vm2370 = vcmp.eq.f32.partialorder %v2369, 8.507059e+37
        %v2371 = vand.u32 %v2106, 2147483648
        %v2372 = vor.u32 1.1754944e-38, %v2371
        %v2373 = vsel %vm2370, %v2372, %v2368
        %v2374 = vmul.f32 %v2248, %v2373
        %v2375 = vrcp.pop %v2109
        %v2376 = vmul.f32 %v2109, %v2375
        %v2377 = vsub.f32 1.0, %v2376
        %v2378 = vmul.f32 %v2375, %v2377
        %v2379 = vadd.f32 %v2375, %v2378
        %vm2380 = vweird.f32 %v2109
        %vm2381 = vweird.f32 %v2375
        %vm2382 = vmor %vm2380, %vm2381
        %v2383 = vsel %vm2382, %v2375, %v2379
        %v2384 = vand.u32 2147483647, %v2109
        %vm2385 = vcmp.eq.f32.partialorder %v2384, 8.507059e+37
        %v2386 = vand.u32 %v2109, 2147483648
        %v2387 = vor.u32 1.1754944e-38, %v2386
        %v2388 = vsel %vm2385, %v2387, %v2383
        %v2389 = vmul.f32 %v2267, %v2388
        %2398 = vrot.lane.b32.xlu0 %v2284, 16
        %v2399 = vpop.permute.xlu0 %2398
        %2400 = vrot.lane.b32.xlu0 %v2299, 16
        %v2401 = vpop.permute.xlu0 %2400
        %2402 = vrot.lane.b32.xlu0 %v2314, 16
        %v2403 = vpop.permute.xlu0 %2402
        %2404 = vrot.lane.b32.xlu0 %v2329, 16
        %v2405 = vpop.permute.xlu0 %2404
        %2406 = vrot.lane.b32.xlu0 %v2344, 16
        %v2407 = vpop.permute.xlu0 %2406
        %2408 = vrot.lane.b32.xlu0 %v2359, 16
        %v2409 = vpop.permute.xlu0 %2408
        %2410 = vrot.lane.b32.xlu0 %v2374, 16
        %v2411 = vpop.permute.xlu0 %2410
        %2412 = vrot.lane.b32.xlu0 %v2389, 16
        %v2413 = vpop.permute.xlu0 %2412
        %v2422 = vsel %vm1250, %v1716, %v2399
        %v2423 = vsel %vm1250, %v1731, %v2401
        %v2424 = vsel %vm1250, %v1746, %v2403
        %v2425 = vsel %vm1250, %v1761, %v2405
        %v2426 = vsel %vm1250, %v1776, %v2407
        %v2427 = vsel %vm1250, %v1791, %v2409
        %v2428 = vsel %vm1250, %v1806, %v2411
        %v2429 = vsel %vm1250, %v1821, %v2413
        %v2430 = vpack.c.bf16 %v2423, %v2422
        %v2431 = vpack.c.bf16 %v2425, %v2424
        %v2432 = vpack.c.bf16 %v2427, %v2426
        %v2433 = vpack.c.bf16 %v2429, %v2428
        %v2434 = vld [vmem:[#allocation14] sm:$0xf]
        %v2435 = vld [vmem:[#allocation14 + $0x4] sm:$0xf]
        %v2436 = vld [vmem:[#allocation14 + $0x8] sm:$0xf]
        %v2437 = vld [vmem:[#allocation14 + $0xc] sm:$0xf]
        %v2438 = vld [vmem:[%s8] sm:$0x1]
        %v2440 = vperm.slane %v2438, 0
        %v2446 = vunpack.c.l.b16 %v2434
        %v2447 = vunpack.c.l.b16 %v2435
        %v2448 = vunpack.c.l.b16 %v2436
        %v2449 = vunpack.c.l.b16 %v2437
        %v2450 = vpack.c.b16 %v2447, %v2446
        %v2451 = vpack.c.b16 %v2449, %v2448
        %v2455 = vsel %vm584, %v2430, 0
        %v2458 = vsel %vm584, %v2431, 0
        %v2461 = vsel %vm584, %v2432, 0
        %v2464 = vsel %vm584, %v2433, 0
        %2466 = vmatpush.bf16.msra.mxu0 0
        %2467 = vmatpush.bf16.msra.mxu0 0
        %2468 = vmatpush.bf16.msra.mxu0 0
        %2469 = vmatpush.bf16.msra.mxu0 0
        %2470 = vmatpush.bf16.msra.mxu0 0
        %2471 = vmatpush.bf16.msra.mxu0 0
        %2472 = vmatpush.bf16.msra.mxu0 %v2451
        %2473 = vmatpush.bf16.msra.mxu0 %v2450
        %2474 = vmatmul.bf16.gmra.mxu0 %v2455
        %v2475 = vpop.f32.mrf.mxu0
        %v2476 = vadd.f32 %v2440, %v2475
        %v2477 = vpop.f32.mrf.mxu0
        %v2478 = vadd.f32 %v2440, %v2477
        %2479 = vmatmul.bf16.gmra.mxu0 %v2458
        %v2480 = vpop.f32.mrf.mxu0
        %v2481 = vadd.f32 %v2440, %v2480
        %v2482 = vpop.f32.mrf.mxu0
        %v2483 = vadd.f32 %v2440, %v2482
        %2484 = vmatmul.bf16.gmra.mxu0 %v2461
        %v2485 = vpop.f32.mrf.mxu0
        %v2486 = vadd.f32 %v2440, %v2485
        %v2487 = vpop.f32.mrf.mxu0
        %v2488 = vadd.f32 %v2440, %v2487
        %2489 = vmatmul.bf16.gmra.mxu0 %v2464
        %v2490 = vpop.f32.mrf.mxu0
        %v2491 = vadd.f32 %v2440, %v2490
        %v2492 = vpop.f32.mrf.mxu0
        %v2493 = vadd.f32 %v2440, %v2492
        %2494 = vdwg.mxu0
        %2495 = vst.msk [vmem:[%s543] sm:$0xff] %vm584, %v2476
        %2496 = vst.msk [vmem:[%s543 + $0x8] sm:$0xff] %vm584, %v2478
        %2497 = vst.msk [vmem:[%s543 + $0x10] sm:$0xff] %vm584, %v2481
        %2498 = vst.msk [vmem:[%s543 + $0x18] sm:$0xff] %vm584, %v2483
        %2499 = vst.msk [vmem:[%s543 + $0x20] sm:$0xff] %vm584, %v2486
        %2500 = vst.msk [vmem:[%s543 + $0x28] sm:$0xff] %vm584, %v2488
        %2501 = vst.msk [vmem:[%s543 + $0x30] sm:$0xff] %vm584, %v2491
        %2502 = vst.msk [vmem:[%s543 + $0x38] sm:$0xff] %vm584, %v2493
        %s2503 = sand.u32 %s283, 1
        %s2504 = scalar_lea.sflag [#allocation4], %s2503
        %s2505 = sand.u32 %s283, 1
        %s2506 = smul.addr %s2505, 64
        %s2507 = scalar_lea.vmem [#allocation16], %s2506
        // Predicated region
        $region97: #{tpu_custom_call.1} parent=63 // pred_check
          %p2508 = pneg %p293
        $region98: #{tpu_custom_call.1} parent=63 // pred_check_branch
          %2510 = sbr.rel (%p2508) target = $region100
        $region99: #{tpu_custom_call.1} parent=63 // pred_region
          %s2511 = smul.u32 8, %s34
          %2513 = vsyncadd %s2504, 0
          %s2514 = smul.addr %s2511, 8
          %s2515 = scalar_lea.hbm %s11, %s2514
          %s2516 = sshll.u32 %s2507, 4
          %s2517 = int_to_ptr.vmem [resolvable:$true] %s2516
          %s2518 = sshll.u32 %s2515, 4
          %s2519 = int_to_ptr.hbm [resolvable:$true] %s2518
          %2524 = dma.vmem_to_hbm [thread:$0]  %s2517, 1024, %s2519, %s2504, 128, 128, 8
        $region100: #{tpu_custom_call.1} parent=63 // pred_fallthru
          _
      $region64: #{tpu_custom_call.1} parent=5 // pred_fallthru
        _
      %p2525 = scmp.le.s32.totalorder 2, %s29
      // Predicated region
      $region101: #{tpu_custom_call.1} parent=5 // pred_check
        %p2526 = pneg %p2525
      $region102: #{tpu_custom_call.1} parent=5 // pred_check_branch
        %2528 = sbr.rel (%p2526) target = $region104
      $region103: #{tpu_custom_call.1} parent=5 // pred_region
        %s2529 = ssub.s32 %s29, 2
        // Predicated region
        $region105: #{tpu_custom_call.1} parent=103 // pred_check
          %p2530 = pneg %p299
        $region106: #{tpu_custom_call.1} parent=103 // pred_check_branch
          %2532 = sbr.rel (%p2530) target = $region108
        $region107: #{tpu_custom_call.1} parent=103 // pred_region
          %s2533 = sand.u32 %s284, 1
          %s2534 = scalar_lea.sflag [#allocation4], %s2533
          %s2535 = sand.u32 %s284, 1
          %s2536 = smul.addr %s2535, 64
          %s2537 = scalar_lea.vmem [#allocation16], %s2536
          %2539 = dma.done %s2534, 1024
        $region108: #{tpu_custom_call.1} parent=103 // pred_fallthru
          _
      $region104: #{tpu_custom_call.1} parent=5 // pred_fallthru
        _
    $region6: #{tpu_custom_call.1} parent=1 // loop_footer
      %s33 = sadd.s32 1, %s29
    $region7: #{tpu_custom_call.1} parent=1 // loop_footer_branch
      %28 = sbr.rel target = $region3
    $region8: #{tpu_custom_call.1} parent=1 // loop_exit
      _
    %2540 = vsyncpa [#allocation3], 1
    %s2541 = scalar_lea.sflag [#allocation3], 1
    %2542 = vsyncpa %s2541, 1
    %2543 = vsyncpa [#allocation6], 1
    %s2544 = scalar_lea.sflag [#allocation6], 1
    %2545 = vsyncpa %s2544, 1
    %2546 = vsyncpa [#allocation9], 1
    %2547 = vsyncpa [#allocation12], 1
    %2548 = vsyncpa [#allocation15], 1
    %2549 = vsyncpa [#allocation4], 1
    %s2550 = scalar_lea.sflag [#allocation4], 1
    %2551 = vsyncpa %s2550, 1

</llo_original>
